<compile_context>
chip_gen: v7x
topology: tpu7x:2x2x1
jax: 0.10.0
libtpu: 0.0.40
codegen_flags: <defaults>
</compile_context>

<pallas_src>
import functools
import math

import jax
import jax.numpy as jnp
from jax import lax
from jax.experimental import pallas as pl
from jax.experimental.pallas import tpu as pltpu

_LN_EPS = 1e-12  # BertLayerNorm default


def _layer_norm(x, gamma, beta):
    mu = jnp.mean(x, axis=-1, keepdims=True)
    xc = x - mu
    var = jnp.mean(xc * xc, axis=-1, keepdims=True)
    return xc * lax.rsqrt(var + _LN_EPS) * gamma + beta


def _cross_encoder_kernel(
    # activations (per batch-chunk grid axis)
    s1_ref,        # (Bc, S1, H) f32   initial s1 hidden states (consumed at l == 0)
    s2_ref,        # (Bc, S2, H) f32
    mask_ref,      # (Bc, 1, S2) f32   additive attention mask
    # per-layer weights (bf16 matmul weights, f32 vectors)
    wq_ref, bq_ref,    # (1, H, H) bf16, (1, 1, H) f32   (1/sqrt(dh) pre-folded)
    wk_ref, bk_ref,    # (1, H, H) bf16, (1, 1, H) f32
    wv_ref, bv_ref,    # (1, H, H) bf16, (1, 1, H) f32
    wao_ref, bao_ref,  # (1, H, H) bf16, (1, 1, H) f32   SelfOutput dense
    g1_ref, be1_ref,   # (1, 1, H) f32                   SelfOutput LayerNorm
    wi_ref, bi_ref,    # (1, H, I) bf16, (1, 1, I) f32   Intermediate dense
    wo_ref, bo_ref,    # (1, I, H) bf16, (1, 1, H) f32   Output dense
    g2_ref, be2_ref,   # (1, 1, H) f32                   Output LayerNorm
    # output
    out_ref,           # (1, Bc, S1, H) f32 -> all_encoder_layers[l, chunk]
    # scratch
    s1_state,          # VMEM (Bc, S1, H) f32, carried across the layer grid axis
    *, num_heads,
):
    l = pl.program_id(1)
    Bc, S1, H = s1_state.shape
    S2 = s2_ref.shape[1]
    nh = num_heads
    dh = H // nh
    bf16 = jnp.bfloat16

    @pl.when(l == 0)
    def _():
        s1_state[...] = s1_ref[...].astype(jnp.float32)

    x1 = s1_state[...].reshape(Bc * S1, H)                       # f32 (residual)
    x1b = x1.astype(bf16)
    x2b = s2_ref[...].reshape(Bc * S2, H).astype(bf16)

    # ---- RobertaCoAttention: full-H lane-dense projections (bf16 -> f32) ----
    q = jnp.dot(x1b, wq_ref[0], preferred_element_type=jnp.float32) + bq_ref[0]
    k = jnp.dot(x2b, wk_ref[0], preferred_element_type=jnp.float32) + bk_ref[0]
    v = jnp.dot(x2b, wv_ref[0], preferred_element_type=jnp.float32) + bv_ref[0]
    qb = q.astype(bf16)
    kb = k.astype(bf16)
    vb = v.astype(bf16)

    # Per-(batch, head) attention: static unrolled loops, 2-D matmuls only.
    ctx_rows = []
    for b in range(Bc):
        q_b = qb[b * S1:(b + 1) * S1, :]
        k_b = kb[b * S2:(b + 1) * S2, :]
        v_b = vb[b * S2:(b + 1) * S2, :]
        add_mask = mask_ref[b]                                   # (1, S2) f32
        head_parts = []
        for n in range(nh):
            qn = q_b[:, n * dh:(n + 1) * dh]                     # (S1, dh)
            kn = k_b[:, n * dh:(n + 1) * dh]                     # (S2, dh)
            vn = v_b[:, n * dh:(n + 1) * dh]                     # (S2, dh)
            s = jnp.einsum("qd,kd->qk", qn, kn,
                           preferred_element_type=jnp.float32) + add_mask
            m = jnp.max(s, axis=-1, keepdims=True)
            e = jnp.exp(s - m)
            # TODO(synk): attention-probs dropout is identity in eval-mode forward.
            p = e * pl.reciprocal(jnp.sum(e, axis=-1, keepdims=True), approx=True)
            head_parts.append(
                jnp.dot(p.astype(bf16), vn, preferred_element_type=jnp.float32))
        ctx_rows.append(jnp.concatenate(head_parts, axis=-1))    # (S1, H)
    ctx = ctx_rows[0] if Bc == 1 else jnp.concatenate(ctx_rows, axis=0)

    # ---- RobertaSelfOutput: single K=H contraction + residual + LayerNorm ---
    ao = jnp.dot(ctx.astype(bf16), wao_ref[0],
                 preferred_element_type=jnp.float32) + bao_ref[0]
    h1 = _layer_norm(ao + x1, g1_ref[0], be1_ref[0])

    # ---- RobertaIntermediate (dense + GELU) ---------------------------------
    # TODO(synk): PyTorch RobertaIntermediate defaults to erf-based GELU; the
    # tanh approximation is used here (and in the in-script reference) for
    # robust Mosaic lowering.
    inter = jax.nn.gelu(
        jnp.dot(h1.astype(bf16), wi_ref[0],
                preferred_element_type=jnp.float32) + bi_ref[0],
        approximate=True)

    # ---- RobertaOutput (dense + residual + LayerNorm) -----------------------
    oo = jnp.dot(inter.astype(bf16), wo_ref[0],
                 preferred_element_type=jnp.float32) + bo_ref[0]
    h2 = _layer_norm(oo + h1, g2_ref[0], be2_ref[0])

    s1_state[...] = h2.reshape(Bc, S1, H)
    out_ref[...] = h2.reshape(1, Bc, S1, H).astype(out_ref.dtype)


@functools.partial(jax.jit, static_argnames=("num_heads", "batch_chunks"))
def roberta_cross_encoder(s1, s2, s2_attention_mask, params, num_heads,
                          batch_chunks=2):
    """s1: (B, S1, H); s2: (B, S2, H); s2_attention_mask: (B, 1, 1, S2) additive.

    params: dict of stacked per-layer weights, dense weights stored as (in, out)
    so activations are `x @ W + b`.  Returns all layer outputs: (L, B, S1, H).

    batch_chunks: number of batch chunks forming the leading "parallel" grid
    axis (2 keeps both v7x TensorCores busy; use 1 on v5e/v6e for minimal
    per-layer weight re-fetch).
    """
    B, S1, H = s1.shape
    S2 = s2.shape[1]
    L = params["wq"].shape[0]
    I = params["wi"].shape[2]
    nh = num_heads
    dh = H // nh

    NB = batch_chunks if (batch_chunks > 0 and B % batch_chunks == 0) else 1
    Bc = B // NB

    bf16 = jnp.bfloat16
    scale = 1.0 / math.sqrt(dh)

    # One-time weight prep: bf16 matmul weights, f32 vectors, scale folded.
    wq = (params["wq"] * scale).astype(bf16)
    bq = (params["bq"] * scale).astype(jnp.float32).reshape(L, 1, H)
    wk = params["wk"].astype(bf16)
    bk = params["bk"].reshape(L, 1, H)
    wv = params["wv"].astype(bf16)
    bv = params["bv"].reshape(L, 1, H)
    wao = params["wao"].astype(bf16)
    bao = params["bao"].reshape(L, 1, H)
    g1 = params["ln1_g"].reshape(L, 1, H)
    be1 = params["ln1_b"].reshape(L, 1, H)
    wi = params["wi"].astype(bf16)
    bi = params["bi"].reshape(L, 1, I)
    wo = params["wo"].astype(bf16)
    bo = params["bo"].reshape(L, 1, H)
    g2 = params["ln2_g"].reshape(L, 1, H)
    be2 = params["ln2_b"].reshape(L, 1, H)

    mask3 = s2_attention_mask.reshape(B, 1, S2).astype(jnp.float32)

    def chunk_spec(shape):   # indexed by the batch-chunk grid axis
        zeros = (0,) * (len(shape) - 1)
        return pl.BlockSpec(shape, lambda c, l: (c,) + zeros)

    def layer_spec(shape):   # indexed by the layer grid axis
        zeros = (0,) * (len(shape) - 1)
        return pl.BlockSpec(shape, lambda c, l: (l,) + zeros)

    in_specs = [
        chunk_spec((Bc, S1, H)),                     # s1
        chunk_spec((Bc, S2, H)),                     # s2
        chunk_spec((Bc, 1, S2)),                     # mask
        layer_spec((1, H, H)), layer_spec((1, 1, H)),   # wq, bq
        layer_spec((1, H, H)), layer_spec((1, 1, H)),   # wk, bk
        layer_spec((1, H, H)), layer_spec((1, 1, H)),   # wv, bv
        layer_spec((1, H, H)), layer_spec((1, 1, H)),   # wao, bao
        layer_spec((1, 1, H)), layer_spec((1, 1, H)),   # ln1 gamma, beta
        layer_spec((1, H, I)), layer_spec((1, 1, I)),   # wi, bi
        layer_spec((1, I, H)), layer_spec((1, 1, H)),   # wo, bo
        layer_spec((1, 1, H)), layer_spec((1, 1, H)),   # ln2 gamma, beta
    ]
    out_spec = pl.BlockSpec((1, Bc, S1, H), lambda c, l: (l, c, 0, 0))

    # Cost / VMEM sizing (advisory; keeps headroom under v7x's 64 MiB VMEM).
    flops = int(2 * L * B * (2 * S1 * H * H + 2 * S2 * H * H
                             + 2 * S1 * S2 * H + 2 * S1 * H * I))
    transcendentals = int(L * B * (nh * S1 * S2 + S1 * I))
    w_bytes = 2 * (4 * H * H + 2 * H * I) + 4 * (9 * H + I)      # per-layer weights
    act_bytes = 4 * Bc * (S1 * H + S2 * H + S2)
    bytes_accessed = int(NB * L * w_bytes + NB * act_bytes + 4 * L * B * S1 * H)
    working_set = (2 * w_bytes                      # double-buffered weights
                   + 2 * act_bytes                  # double-buffered activations
                   + 2 * 4 * Bc * S1 * H            # double-buffered output block
                   + 4 * Bc * S1 * (2 * H + I))     # scratch + f32 intermediates
    vmem_limit = int(min(max(2 * working_set + (8 << 20), 32 << 20), 48 << 20))

    kernel = functools.partial(_cross_encoder_kernel, num_heads=nh)

    return pl.pallas_call(
        kernel,
        out_shape=jax.ShapeDtypeStruct((L, B, S1, H), jnp.float32),
        grid=(NB, L),
        in_specs=in_specs,
        out_specs=out_spec,
        scratch_shapes=[pltpu.VMEM((Bc, S1, H), jnp.float32)],
        compiler_params=pltpu.CompilerParams(
            dimension_semantics=("parallel", "arbitrary"),
            vmem_limit_bytes=vmem_limit),
        cost_estimate=pl.CostEstimate(flops=flops,
                                      transcendentals=transcendentals,
                                      bytes_accessed=bytes_accessed),
    )(s1, s2, mask3,
      wq, bq, wk, bk, wv, bv,
      wao, bao, g1, be1, wi, bi, wo, bo, g2, be2)


def make_params(key, layer_num, hidden, intermediate, scale=0.05):
    """Deterministic synthetic parameters (dense weights stored as (in, out))."""
    L, H, I = layer_num, hidden, intermediate
    ks = jax.random.split(key, 18)

    def d(k, shape):
        return scale * jax.random.normal(k, shape, jnp.float32)

    return dict(
        wq=d(ks[0], (L, H, H)), bq=d(ks[1], (L, H)),
        wk=d(ks[2], (L, H, H)), bk=d(ks[3], (L, H)),
        wv=d(ks[4], (L, H, H)), bv=d(ks[5], (L, H)),
        wao=d(ks[6], (L, H, H)), bao=d(ks[7], (L, H)),
        ln1_g=1.0 + 0.1 * jax.random.normal(ks[8], (L, H), jnp.float32),
        ln1_b=0.05 * jax.random.normal(ks[9], (L, H), jnp.float32),
        wi=d(ks[10], (L, H, I)), bi=d(ks[11], (L, I)),
        wo=d(ks[12], (L, I, H)), bo=d(ks[13], (L, H)),
        ln2_g=1.0 + 0.1 * jax.random.normal(ks[14], (L, H), jnp.float32),
        ln2_b=0.05 * jax.random.normal(ks[15], (L, H), jnp.float32),
    )


def _reference(s1, s2, s2_attention_mask, params, num_heads):
    """Pure-JAX (XLA, full f32) reference mirroring the PyTorch forward (eval)."""
    L = params["wq"].shape[0]
    B, S1, H = s1.shape
    S2 = s2.shape[1]
    nh = num_heads
    dh = H // nh
    add_mask = s2_attention_mask.reshape(B, 1, 1, S2)

    outs = []
    x1 = s1
    for l in range(L):
        q = x1 @ params["wq"][l] + params["bq"][l]
        k = s2 @ params["wk"][l] + params["bk"][l]
        v = s2 @ params["wv"][l] + params["bv"][l]
        qh = q.reshape(B, S1, nh, dh).transpose(0, 2, 1, 3)
        kh = k.reshape(B, S2, nh, dh).transpose(0, 2, 1, 3)
        vh = v.reshape(B, S2, nh, dh).transpose(0, 2, 1, 3)
        sc = jnp.einsum("bnqd,bnkd->bnqk", qh, kh) / math.sqrt(dh) + add_mask
        p = jax.nn.softmax(sc, axis=-1)
        ctx = jnp.einsum("bnqk,bnkd->bnqd", p, vh)
        ctx = ctx.transpose(0, 2, 1, 3).reshape(B, S1, H)
        ao = ctx @ params["wao"][l] + params["bao"][l]
        h1 = _layer_norm(ao + x1, params["ln1_g"][l], params["ln1_b"][l])
        inter = jax.nn.gelu(h1 @ params["wi"][l] + params["bi"][l],
                            approximate=True)
        oo = inter @ params["wo"][l] + params["bo"][l]
        h2 = _layer_norm(oo + h1, params["ln2_g"][l], params["ln2_b"][l])
        outs.append(h2)
        x1 = h2
    return jnp.stack(outs, axis=0)


if __name__ == "__main__":
    key = jax.random.PRNGKey(0)
    k1, k2, k3, kp = jax.random.split(key, 4)

    B, S1, S2 = 2, 16, 8          # batch, s1 seq len, s2 seq len
    H, NH, I = 64, 4, 256         # hidden, heads, intermediate
    LAYERS = 2

    s1 = jax.random.normal(k1, (B, S1, H), jnp.float32)
    s2 = jax.random.normal(k2, (B, S2, H), jnp.float32)
    # BERT-style extended additive mask: 0 = attend, -10000 = masked.
    keep = (jax.random.uniform(k3, (B, S2)) > 0.25).astype(jnp.float32)
    mask = ((1.0 - keep) * -10000.0).reshape(B, 1, 1, S2)

    params = make_params(kp, LAYERS, H, I)

    out = roberta_cross_encoder(s1, s2, mask, params, num_heads=NH,
                                batch_chunks=2)
    out = jax.block_until_ready(out)

    ref = _reference(s1, s2, mask, params, NH)
    assert out.shape == (LAYERS, B, S1, H)
    max_err = float(jnp.max(jnp.abs(out - ref)))
    mean_err = float(jnp.mean(jnp.abs(out - ref)))
    # bf16 matmul weights/operands vs. f32 reference -> bf16-level tolerance.
    assert max_err < 0.15 and mean_err < 0.02, f"max {max_err} mean {mean_err}"

    print("KERNEL_OK")
</pallas_src>

<mosaic_0001>
module attributes {stable_mosaic.version = 11 : i64} {
  func.func @_cross_encoder_kernel(%arg0: i32, %arg1: i32, %arg2: memref<1x16x64xf32, #tpu.memory_space<vmem>>, %arg3: memref<1x8x64xf32, #tpu.memory_space<vmem>>, %arg4: memref<1x1x8xf32, #tpu.memory_space<vmem>>, %arg5: memref<1x64x64xbf16, #tpu.memory_space<vmem>>, %arg6: memref<1x1x64xf32, #tpu.memory_space<vmem>>, %arg7: memref<1x64x64xbf16, #tpu.memory_space<vmem>>, %arg8: memref<1x1x64xf32, #tpu.memory_space<vmem>>, %arg9: memref<1x64x64xbf16, #tpu.memory_space<vmem>>, %arg10: memref<1x1x64xf32, #tpu.memory_space<vmem>>, %arg11: memref<1x64x64xbf16, #tpu.memory_space<vmem>>, %arg12: memref<1x1x64xf32, #tpu.memory_space<vmem>>, %arg13: memref<1x1x64xf32, #tpu.memory_space<vmem>>, %arg14: memref<1x1x64xf32, #tpu.memory_space<vmem>>, %arg15: memref<1x64x256xbf16, #tpu.memory_space<vmem>>, %arg16: memref<1x1x256xf32, #tpu.memory_space<vmem>>, %arg17: memref<1x256x64xbf16, #tpu.memory_space<vmem>>, %arg18: memref<1x1x64xf32, #tpu.memory_space<vmem>>, %arg19: memref<1x1x64xf32, #tpu.memory_space<vmem>>, %arg20: memref<1x1x64xf32, #tpu.memory_space<vmem>>, %arg21: memref<1x1x16x64xf32, #tpu.memory_space<vmem>>, %arg22: memref<1x16x64xf32, #tpu.memory_space<vmem>>) attributes {dimension_semantics = [#tpu.dimension_semantics<parallel>, #tpu.dimension_semantics<arbitrary>], iteration_bounds = array<i64: 2, 2>, scalar_prefetch = 0 : i64, scratch_operands = 1 : i64, tpu.core_type = #tpu.core_type<tc>, window_params = [{transform_indices = @transform_0, window_bounds = array<i64: 1, 16, 64>}, {transform_indices = @transform_1, window_bounds = array<i64: 1, 8, 64>}, {transform_indices = @transform_2, window_bounds = array<i64: 1, 1, 8>}, {transform_indices = @transform_3, window_bounds = array<i64: 1, 64, 64>}, {transform_indices = @transform_4, window_bounds = array<i64: 1, 1, 64>}, {transform_indices = @transform_5, window_bounds = array<i64: 1, 64, 64>}, {transform_indices = @transform_6, window_bounds = array<i64: 1, 1, 64>}, {transform_indices = @transform_7, window_bounds = array<i64: 1, 64, 64>}, {transform_indices = @transform_8, window_bounds = array<i64: 1, 1, 64>}, {transform_indices = @transform_9, window_bounds = array<i64: 1, 64, 64>}, {transform_indices = @transform_10, window_bounds = array<i64: 1, 1, 64>}, {transform_indices = @transform_11, window_bounds = array<i64: 1, 1, 64>}, {transform_indices = @transform_12, window_bounds = array<i64: 1, 1, 64>}, {transform_indices = @transform_13, window_bounds = array<i64: 1, 64, 256>}, {transform_indices = @transform_14, window_bounds = array<i64: 1, 1, 256>}, {transform_indices = @transform_15, window_bounds = array<i64: 1, 256, 64>}, {transform_indices = @transform_16, window_bounds = array<i64: 1, 1, 64>}, {transform_indices = @transform_17, window_bounds = array<i64: 1, 1, 64>}, {transform_indices = @transform_18, window_bounds = array<i64: 1, 1, 64>}, {transform_indices = @transform_19, window_bounds = array<i64: 1, 1, 16, 64>}]} {
    %c0_i32 = arith.constant 0 : i32
    %0 = arith.cmpi eq, %arg1, %c0_i32 : i32
    %1 = arith.extui %0 : i1 to i32
    %c0_i32_0 = arith.constant 0 : i32
    %2 = arith.cmpi ne, %1, %c0_i32_0 : i32
    scf.if %2 {
      %c0_99 = arith.constant 0 : index
      %c0_100 = arith.constant 0 : index
      %c0_101 = arith.constant 0 : index
      %199 = vector.load %arg2[%c0_99, %c0_100, %c0_101] : memref<1x16x64xf32, #tpu.memory_space<vmem>>, vector<1x16x64xf32>
      %c0_102 = arith.constant 0 : index
      %c0_103 = arith.constant 0 : index
      %c0_104 = arith.constant 0 : index
      %200 = vector.load %arg22[%c0_102, %c0_103, %c0_104] : memref<1x16x64xf32, #tpu.memory_space<vmem>>, vector<1x16x64xf32>
      tpu.vector_store %arg22[%c0_102, %c0_103, %c0_104], %199 {strides = array<i32>} : memref<1x16x64xf32, #tpu.memory_space<vmem>>, vector<1x16x64xf32>,
    } else {
    }
    %c0 = arith.constant 0 : index
    %c0_1 = arith.constant 0 : index
    %c0_2 = arith.constant 0 : index
    %3 = vector.load %arg22[%c0, %c0_1, %c0_2] : memref<1x16x64xf32, #tpu.memory_space<vmem>>, vector<1x16x64xf32>
    %4 = vector.shape_cast %3 : vector<1x16x64xf32> to vector<16x64xf32>
    %5 = arith.truncf %4 : vector<16x64xf32> to vector<16x64xbf16>
    %c0_3 = arith.constant 0 : index
    %c0_4 = arith.constant 0 : index
    %c0_5 = arith.constant 0 : index
    %6 = vector.load %arg3[%c0_3, %c0_4, %c0_5] : memref<1x8x64xf32, #tpu.memory_space<vmem>>, vector<1x8x64xf32>
    %7 = vector.shape_cast %6 : vector<1x8x64xf32> to vector<8x64xf32>
    %8 = arith.truncf %7 : vector<8x64xf32> to vector<8x64xbf16>
    %c0_6 = arith.constant 0 : index
    %c0_7 = arith.constant 0 : index
    %c0_8 = arith.constant 0 : index
    %9 = vector.load %arg5[%c0_6, %c0_7, %c0_8] : memref<1x64x64xbf16, #tpu.memory_space<vmem>>, vector<1x64x64xbf16>
    %10 = vector.shape_cast %9 : vector<1x64x64xbf16> to vector<64x64xbf16>
    %cst = arith.constant dense<0.000000e+00> : vector<16x64xf32>
    %11 = tpu.matmul %5, %10, %cst {dimension_numbers = #tpu.dot_dimension_numbers<[1], [0], [0], [1], [0, 0, 1, 1], [], []>} : vector<16x64xbf16>, vector<64x64xbf16>, vector<16x64xf32> -> vector<16x64xf32>
    %c0_9 = arith.constant 0 : index
    %c0_10 = arith.constant 0 : index
    %c0_11 = arith.constant 0 : index
    %12 = vector.load %arg6[%c0_9, %c0_10, %c0_11] : memref<1x1x64xf32, #tpu.memory_space<vmem>>, vector<1x1x64xf32>
    %13 = vector.shape_cast %12 : vector<1x1x64xf32> to vector<1x64xf32>
    %14 = vector.broadcast %13 : vector<1x64xf32> to vector<16x64xf32>
    %15 = arith.addf %11, %14 : vector<16x64xf32>
    %c0_12 = arith.constant 0 : index
    %c0_13 = arith.constant 0 : index
    %c0_14 = arith.constant 0 : index
    %16 = vector.load %arg7[%c0_12, %c0_13, %c0_14] : memref<1x64x64xbf16, #tpu.memory_space<vmem>>, vector<1x64x64xbf16>
    %17 = vector.shape_cast %16 : vector<1x64x64xbf16> to vector<64x64xbf16>
    %cst_15 = arith.constant dense<0.000000e+00> : vector<8x64xf32>
    %18 = tpu.matmul %8, %17, %cst_15 {dimension_numbers = #tpu.dot_dimension_numbers<[1], [0], [0], [1], [0, 0, 1, 1], [], []>} : vector<8x64xbf16>, vector<64x64xbf16>, vector<8x64xf32> -> vector<8x64xf32>
    %c0_16 = arith.constant 0 : index
    %c0_17 = arith.constant 0 : index
    %c0_18 = arith.constant 0 : index
    %19 = vector.load %arg8[%c0_16, %c0_17, %c0_18] : memref<1x1x64xf32, #tpu.memory_space<vmem>>, vector<1x1x64xf32>
    %20 = vector.shape_cast %19 : vector<1x1x64xf32> to vector<1x64xf32>
    %21 = vector.broadcast %20 : vector<1x64xf32> to vector<8x64xf32>
    %22 = arith.addf %18, %21 : vector<8x64xf32>
    %c0_19 = arith.constant 0 : index
    %c0_20 = arith.constant 0 : index
    %c0_21 = arith.constant 0 : index
    %23 = vector.load %arg9[%c0_19, %c0_20, %c0_21] : memref<1x64x64xbf16, #tpu.memory_space<vmem>>, vector<1x64x64xbf16>
    %24 = vector.shape_cast %23 : vector<1x64x64xbf16> to vector<64x64xbf16>
    %cst_22 = arith.constant dense<0.000000e+00> : vector<8x64xf32>
    %25 = tpu.matmul %8, %24, %cst_22 {dimension_numbers = #tpu.dot_dimension_numbers<[1], [0], [0], [1], [0, 0, 1, 1], [], []>} : vector<8x64xbf16>, vector<64x64xbf16>, vector<8x64xf32> -> vector<8x64xf32>
    %c0_23 = arith.constant 0 : index
    %c0_24 = arith.constant 0 : index
    %c0_25 = arith.constant 0 : index
    %26 = vector.load %arg10[%c0_23, %c0_24, %c0_25] : memref<1x1x64xf32, #tpu.memory_space<vmem>>, vector<1x1x64xf32>
    %27 = vector.shape_cast %26 : vector<1x1x64xf32> to vector<1x64xf32>
    %28 = vector.broadcast %27 : vector<1x64xf32> to vector<8x64xf32>
    %29 = arith.addf %25, %28 : vector<8x64xf32>
    %30 = arith.truncf %15 : vector<16x64xf32> to vector<16x64xbf16>
    %31 = arith.truncf %22 : vector<8x64xf32> to vector<8x64xbf16>
    %32 = arith.truncf %29 : vector<8x64xf32> to vector<8x64xbf16>
    %c0_26 = arith.constant 0 : index
    %c0_27 = arith.constant 0 : index
    %c0_28 = arith.constant 0 : index
    %33 = vector.load %arg4[%c0_26, %c0_27, %c0_28] : memref<1x1x8xf32, #tpu.memory_space<vmem>>, vector<1x1x8xf32>
    %34 = vector.shape_cast %33 : vector<1x1x8xf32> to vector<1x8xf32>
    %35 = vector.extract_strided_slice %30 {offsets = [0, 0], sizes = [16, 16], strides = [1, 1]} : vector<16x64xbf16> to vector<16x16xbf16>
    %36 = vector.extract_strided_slice %31 {offsets = [0, 0], sizes = [8, 16], strides = [1, 1]} : vector<8x64xbf16> to vector<8x16xbf16>
    %37 = vector.extract_strided_slice %32 {offsets = [0, 0], sizes = [8, 16], strides = [1, 1]} : vector<8x64xbf16> to vector<8x16xbf16>
    "tpu.trace_start"() <{level = 10 : i32, message = "qd,kd->qk"}> : () -> ()
    %cst_29 = arith.constant dense<0.000000e+00> : vector<16x8xf32>
    %38 = tpu.matmul %35, %36, %cst_29 {dimension_numbers = #tpu.dot_dimension_numbers<[1], [1], [0], [0], [0, 0, 1, 0], [], []>} : vector<16x16xbf16>, vector<8x16xbf16>, vector<16x8xf32> -> vector<16x8xf32>
    "tpu.trace_stop"() : () -> ()
    %39 = vector.broadcast %34 : vector<1x8xf32> to vector<16x8xf32>
    %40 = arith.addf %38, %39 : vector<16x8xf32>
    %cst_30 = arith.constant dense<0xFF800000> : vector<16xf32>
    %41 = vector.multi_reduction <maximumf>, %40, %cst_30 [1] : vector<16x8xf32> to vector<16xf32>
    %42 = vector.shape_cast %41 : vector<16xf32> to vector<16x1xf32>
    %43 = vector.broadcast %42 : vector<16x1xf32> to vector<16x8xf32>
    %44 = arith.subf %40, %43 : vector<16x8xf32>
    %45 = math.exp %44 : vector<16x8xf32>
    %cst_31 = arith.constant dense<0.000000e+00> : vector<16xf32>
    %46 = vector.multi_reduction <add>, %45, %cst_31 [1] : vector<16x8xf32> to vector<16xf32>
    %47 = vector.shape_cast %46 : vector<16xf32> to vector<16x1xf32>
    %48 = tpu.reciprocal %47 {approx = true} : vector<16x1xf32> -> vector<16x1xf32>
    %49 = vector.broadcast %48 : vector<16x1xf32> to vector<16x8xf32>
    %50 = arith.mulf %45, %49 : vector<16x8xf32>
    %51 = arith.truncf %50 : vector<16x8xf32> to vector<16x8xbf16>
    %cst_32 = arith.constant dense<0.000000e+00> : vector<16x16xf32>
    %52 = tpu.matmul %51, %37, %cst_32 {dimension_numbers = #tpu.dot_dimension_numbers<[1], [0], [0], [1], [0, 0, 1, 1], [], []>} : vector<16x8xbf16>, vector<8x16xbf16>, vector<16x16xf32> -> vector<16x16xf32>
    %53 = vector.extract_strided_slice %30 {offsets = [0, 16], sizes = [16, 16], strides = [1, 1]} : vector<16x64xbf16> to vector<16x16xbf16>
    %54 = vector.extract_strided_slice %31 {offsets = [0, 16], sizes = [8, 16], strides = [1, 1]} : vector<8x64xbf16> to vector<8x16xbf16>
    %55 = vector.extract_strided_slice %32 {offsets = [0, 16], sizes = [8, 16], strides = [1, 1]} : vector<8x64xbf16> to vector<8x16xbf16>
    "tpu.trace_start"() <{level = 10 : i32, message = "qd,kd->qk"}> : () -> ()
    %cst_33 = arith.constant dense<0.000000e+00> : vector<16x8xf32>
    %56 = tpu.matmul %53, %54, %cst_33 {dimension_numbers = #tpu.dot_dimension_numbers<[1], [1], [0], [0], [0, 0, 1, 0], [], []>} : vector<16x16xbf16>, vector<8x16xbf16>, vector<16x8xf32> -> vector<16x8xf32>
    "tpu.trace_stop"() : () -> ()
    %57 = vector.broadcast %34 : vector<1x8xf32> to vector<16x8xf32>
    %58 = arith.addf %56, %57 : vector<16x8xf32>
    %cst_34 = arith.constant dense<0xFF800000> : vector<16xf32>
    %59 = vector.multi_reduction <maximumf>, %58, %cst_34 [1] : vector<16x8xf32> to vector<16xf32>
    %60 = vector.shape_cast %59 : vector<16xf32> to vector<16x1xf32>
    %61 = vector.broadcast %60 : vector<16x1xf32> to vector<16x8xf32>
    %62 = arith.subf %58, %61 : vector<16x8xf32>
    %63 = math.exp %62 : vector<16x8xf32>
    %cst_35 = arith.constant dense<0.000000e+00> : vector<16xf32>
    %64 = vector.multi_reduction <add>, %63, %cst_35 [1] : vector<16x8xf32> to vector<16xf32>
    %65 = vector.shape_cast %64 : vector<16xf32> to vector<16x1xf32>
    %66 = tpu.reciprocal %65 {approx = true} : vector<16x1xf32> -> vector<16x1xf32>
    %67 = vector.broadcast %66 : vector<16x1xf32> to vector<16x8xf32>
    %68 = arith.mulf %63, %67 : vector<16x8xf32>
    %69 = arith.truncf %68 : vector<16x8xf32> to vector<16x8xbf16>
    %cst_36 = arith.constant dense<0.000000e+00> : vector<16x16xf32>
    %70 = tpu.matmul %69, %55, %cst_36 {dimension_numbers = #tpu.dot_dimension_numbers<[1], [0], [0], [1], [0, 0, 1, 1], [], []>} : vector<16x8xbf16>, vector<8x16xbf16>, vector<16x16xf32> -> vector<16x16xf32>
    %71 = vector.extract_strided_slice %30 {offsets = [0, 32], sizes = [16, 16], strides = [1, 1]} : vector<16x64xbf16> to vector<16x16xbf16>
    %72 = vector.extract_strided_slice %31 {offsets = [0, 32], sizes = [8, 16], strides = [1, 1]} : vector<8x64xbf16> to vector<8x16xbf16>
    %73 = vector.extract_strided_slice %32 {offsets = [0, 32], sizes = [8, 16], strides = [1, 1]} : vector<8x64xbf16> to vector<8x16xbf16>
    "tpu.trace_start"() <{level = 10 : i32, message = "qd,kd->qk"}> : () -> ()
    %cst_37 = arith.constant dense<0.000000e+00> : vector<16x8xf32>
    %74 = tpu.matmul %71, %72, %cst_37 {dimension_numbers = #tpu.dot_dimension_numbers<[1], [1], [0], [0], [0, 0, 1, 0], [], []>} : vector<16x16xbf16>, vector<8x16xbf16>, vector<16x8xf32> -> vector<16x8xf32>
    "tpu.trace_stop"() : () -> ()
    %75 = vector.broadcast %34 : vector<1x8xf32> to vector<16x8xf32>
    %76 = arith.addf %74, %75 : vector<16x8xf32>
    %cst_38 = arith.constant dense<0xFF800000> : vector<16xf32>
    %77 = vector.multi_reduction <maximumf>, %76, %cst_38 [1] : vector<16x8xf32> to vector<16xf32>
    %78 = vector.shape_cast %77 : vector<16xf32> to vector<16x1xf32>
    %79 = vector.broadcast %78 : vector<16x1xf32> to vector<16x8xf32>
    %80 = arith.subf %76, %79 : vector<16x8xf32>
    %81 = math.exp %80 : vector<16x8xf32>
    %cst_39 = arith.constant dense<0.000000e+00> : vector<16xf32>
    %82 = vector.multi_reduction <add>, %81, %cst_39 [1] : vector<16x8xf32> to vector<16xf32>
    %83 = vector.shape_cast %82 : vector<16xf32> to vector<16x1xf32>
    %84 = tpu.reciprocal %83 {approx = true} : vector<16x1xf32> -> vector<16x1xf32>
    %85 = vector.broadcast %84 : vector<16x1xf32> to vector<16x8xf32>
    %86 = arith.mulf %81, %85 : vector<16x8xf32>
    %87 = arith.truncf %86 : vector<16x8xf32> to vector<16x8xbf16>
    %cst_40 = arith.constant dense<0.000000e+00> : vector<16x16xf32>
    %88 = tpu.matmul %87, %73, %cst_40 {dimension_numbers = #tpu.dot_dimension_numbers<[1], [0], [0], [1], [0, 0, 1, 1], [], []>} : vector<16x8xbf16>, vector<8x16xbf16>, vector<16x16xf32> -> vector<16x16xf32>
    %89 = vector.extract_strided_slice %30 {offsets = [0, 48], sizes = [16, 16], strides = [1, 1]} : vector<16x64xbf16> to vector<16x16xbf16>
    %90 = vector.extract_strided_slice %31 {offsets = [0, 48], sizes = [8, 16], strides = [1, 1]} : vector<8x64xbf16> to vector<8x16xbf16>
    %91 = vector.extract_strided_slice %32 {offsets = [0, 48], sizes = [8, 16], strides = [1, 1]} : vector<8x64xbf16> to vector<8x16xbf16>
    "tpu.trace_start"() <{level = 10 : i32, message = "qd,kd->qk"}> : () -> ()
    %cst_41 = arith.constant dense<0.000000e+00> : vector<16x8xf32>
    %92 = tpu.matmul %89, %90, %cst_41 {dimension_numbers = #tpu.dot_dimension_numbers<[1], [1], [0], [0], [0, 0, 1, 0], [], []>} : vector<16x16xbf16>, vector<8x16xbf16>, vector<16x8xf32> -> vector<16x8xf32>
    "tpu.trace_stop"() : () -> ()
    %93 = vector.broadcast %34 : vector<1x8xf32> to vector<16x8xf32>
    %94 = arith.addf %92, %93 : vector<16x8xf32>
    %cst_42 = arith.constant dense<0xFF800000> : vector<16xf32>
    %95 = vector.multi_reduction <maximumf>, %94, %cst_42 [1] : vector<16x8xf32> to vector<16xf32>
    %96 = vector.shape_cast %95 : vector<16xf32> to vector<16x1xf32>
    %97 = vector.broadcast %96 : vector<16x1xf32> to vector<16x8xf32>
    %98 = arith.subf %94, %97 : vector<16x8xf32>
    %99 = math.exp %98 : vector<16x8xf32>
    %cst_43 = arith.constant dense<0.000000e+00> : vector<16xf32>
    %100 = vector.multi_reduction <add>, %99, %cst_43 [1] : vector<16x8xf32> to vector<16xf32>
    %101 = vector.shape_cast %100 : vector<16xf32> to vector<16x1xf32>
    %102 = tpu.reciprocal %101 {approx = true} : vector<16x1xf32> -> vector<16x1xf32>
    %103 = vector.broadcast %102 : vector<16x1xf32> to vector<16x8xf32>
    %104 = arith.mulf %99, %103 : vector<16x8xf32>
    %105 = arith.truncf %104 : vector<16x8xf32> to vector<16x8xbf16>
    %cst_44 = arith.constant dense<0.000000e+00> : vector<16x16xf32>
    %106 = tpu.matmul %105, %91, %cst_44 {dimension_numbers = #tpu.dot_dimension_numbers<[1], [0], [0], [1], [0, 0, 1, 1], [], []>} : vector<16x8xbf16>, vector<8x16xbf16>, vector<16x16xf32> -> vector<16x16xf32>
    %107 = tpu.concatenate %52, %70, %88, %106 in 1 : vector<16x16xf32>, vector<16x16xf32>, vector<16x16xf32>, vector<16x16xf32> -> vector<16x64xf32>
    %108 = arith.truncf %107 : vector<16x64xf32> to vector<16x64xbf16>
    %c0_45 = arith.constant 0 : index
    %c0_46 = arith.constant 0 : index
    %c0_47 = arith.constant 0 : index
    %109 = vector.load %arg11[%c0_45, %c0_46, %c0_47] : memref<1x64x64xbf16, #tpu.memory_space<vmem>>, vector<1x64x64xbf16>
    %110 = vector.shape_cast %109 : vector<1x64x64xbf16> to vector<64x64xbf16>
    %cst_48 = arith.constant dense<0.000000e+00> : vector<16x64xf32>
    %111 = tpu.matmul %108, %110, %cst_48 {dimension_numbers = #tpu.dot_dimension_numbers<[1], [0], [0], [1], [0, 0, 1, 1], [], []>} : vector<16x64xbf16>, vector<64x64xbf16>, vector<16x64xf32> -> vector<16x64xf32>
    %c0_49 = arith.constant 0 : index
    %c0_50 = arith.constant 0 : index
    %c0_51 = arith.constant 0 : index
    %112 = vector.load %arg12[%c0_49, %c0_50, %c0_51] : memref<1x1x64xf32, #tpu.memory_space<vmem>>, vector<1x1x64xf32>
    %113 = vector.shape_cast %112 : vector<1x1x64xf32> to vector<1x64xf32>
    %114 = vector.broadcast %113 : vector<1x64xf32> to vector<16x64xf32>
    %115 = arith.addf %111, %114 : vector<16x64xf32>
    %116 = arith.addf %115, %4 : vector<16x64xf32>
    %c0_52 = arith.constant 0 : index
    %c0_53 = arith.constant 0 : index
    %c0_54 = arith.constant 0 : index
    %117 = vector.load %arg13[%c0_52, %c0_53, %c0_54] : memref<1x1x64xf32, #tpu.memory_space<vmem>>, vector<1x1x64xf32>
    %118 = vector.shape_cast %117 : vector<1x1x64xf32> to vector<1x64xf32>
    %c0_55 = arith.constant 0 : index
    %c0_56 = arith.constant 0 : index
    %c0_57 = arith.constant 0 : index
    %119 = vector.load %arg14[%c0_55, %c0_56, %c0_57] : memref<1x1x64xf32, #tpu.memory_space<vmem>>, vector<1x1x64xf32>
    %120 = vector.shape_cast %119 : vector<1x1x64xf32> to vector<1x64xf32>
    %cst_58 = arith.constant dense<0.000000e+00> : vector<16xf32>
    %121 = vector.multi_reduction <add>, %116, %cst_58 [1] : vector<16x64xf32> to vector<16xf32>
    %122 = vector.shape_cast %121 : vector<16xf32> to vector<16x1xf32>
    %cst_59 = arith.constant 6.400000e+01 : f32
    %123 = vector.broadcast %cst_59 : f32 to vector<16x1xf32>
    %124 = arith.divf %122, %123 : vector<16x1xf32>
    %125 = vector.broadcast %124 : vector<16x1xf32> to vector<16x64xf32>
    %126 = arith.subf %116, %125 : vector<16x64xf32>
    %127 = arith.mulf %126, %126 : vector<16x64xf32>
    %cst_60 = arith.constant dense<0.000000e+00> : vector<16xf32>
    %128 = vector.multi_reduction <add>, %127, %cst_60 [1] : vector<16x64xf32> to vector<16xf32>
    %129 = vector.shape_cast %128 : vector<16xf32> to vector<16x1xf32>
    %cst_61 = arith.constant 6.400000e+01 : f32
    %130 = vector.broadcast %cst_61 : f32 to vector<16x1xf32>
    %131 = arith.divf %129, %130 : vector<16x1xf32>
    %cst_62 = arith.constant 9.99999996E-13 : f32
    %132 = vector.broadcast %cst_62 : f32 to vector<16x1xf32>
    %133 = arith.addf %131, %132 : vector<16x1xf32>
    %134 = math.rsqrt %133 : vector<16x1xf32>
    %135 = vector.broadcast %134 : vector<16x1xf32> to vector<16x64xf32>
    %136 = arith.mulf %126, %135 : vector<16x64xf32>
    %137 = vector.broadcast %118 : vector<1x64xf32> to vector<16x64xf32>
    %138 = arith.mulf %136, %137 : vector<16x64xf32>
    %139 = vector.broadcast %120 : vector<1x64xf32> to vector<16x64xf32>
    %140 = arith.addf %138, %139 : vector<16x64xf32>
    %141 = arith.truncf %140 : vector<16x64xf32> to vector<16x64xbf16>
    %c0_63 = arith.constant 0 : index
    %c0_64 = arith.constant 0 : index
    %c0_65 = arith.constant 0 : index
    %142 = vector.load %arg15[%c0_63, %c0_64, %c0_65] : memref<1x64x256xbf16, #tpu.memory_space<vmem>>, vector<1x64x256xbf16>
    %143 = vector.shape_cast %142 : vector<1x64x256xbf16> to vector<64x256xbf16>
    %cst_66 = arith.constant dense<0.000000e+00> : vector<16x256xf32>
    %144 = tpu.matmul %141, %143, %cst_66 {dimension_numbers = #tpu.dot_dimension_numbers<[1], [0], [0], [1], [0, 0, 1, 1], [], []>} : vector<16x64xbf16>, vector<64x256xbf16>, vector<16x256xf32> -> vector<16x256xf32>
    %c0_67 = arith.constant 0 : index
    %c0_68 = arith.constant 0 : index
    %c0_69 = arith.constant 0 : index
    %145 = vector.load %arg16[%c0_67, %c0_68, %c0_69] : memref<1x1x256xf32, #tpu.memory_space<vmem>>, vector<1x1x256xf32>
    %146 = vector.shape_cast %145 : vector<1x1x256xf32> to vector<1x256xf32>
    %147 = vector.broadcast %146 : vector<1x256xf32> to vector<16x256xf32>
    %148 = arith.addf %144, %147 : vector<16x256xf32>
    %149 = arith.mulf %148, %148 : vector<16x256xf32>
    %150 = arith.mulf %148, %149 : vector<16x256xf32>
    %cst_70 = arith.constant 4.471500e-02 : f32
    %151 = vector.broadcast %cst_70 : f32 to vector<16x256xf32>
    %152 = arith.mulf %151, %150 : vector<16x256xf32>
    %153 = arith.addf %148, %152 : vector<16x256xf32>
    %cst_71 = arith.constant 0.797884583 : f32
    %154 = vector.broadcast %cst_71 : f32 to vector<16x256xf32>
    %155 = arith.mulf %154, %153 : vector<16x256xf32>
    %156 = math.tanh %155 : vector<16x256xf32>
    %cst_72 = arith.constant 1.000000e+00 : f32
    %157 = vector.broadcast %cst_72 : f32 to vector<16x256xf32>
    %158 = arith.addf %157, %156 : vector<16x256xf32>
    %cst_73 = arith.constant 5.000000e-01 : f32
    %159 = vector.broadcast %cst_73 : f32 to vector<16x256xf32>
    %160 = arith.mulf %159, %158 : vector<16x256xf32>
    %161 = arith.mulf %148, %160 : vector<16x256xf32>
    %162 = arith.truncf %161 : vector<16x256xf32> to vector<16x256xbf16>
    %c0_74 = arith.constant 0 : index
    %c0_75 = arith.constant 0 : index
    %c0_76 = arith.constant 0 : index
    %163 = vector.load %arg17[%c0_74, %c0_75, %c0_76] : memref<1x256x64xbf16, #tpu.memory_space<vmem>>, vector<1x256x64xbf16>
    %164 = vector.shape_cast %163 : vector<1x256x64xbf16> to vector<256x64xbf16>
    %cst_77 = arith.constant dense<0.000000e+00> : vector<16x64xf32>
    %165 = tpu.matmul %162, %164, %cst_77 {dimension_numbers = #tpu.dot_dimension_numbers<[1], [0], [0], [1], [0, 0, 1, 1], [], []>} : vector<16x256xbf16>, vector<256x64xbf16>, vector<16x64xf32> -> vector<16x64xf32>
    %c0_78 = arith.constant 0 : index
    %c0_79 = arith.constant 0 : index
    %c0_80 = arith.constant 0 : index
    %166 = vector.load %arg18[%c0_78, %c0_79, %c0_80] : memref<1x1x64xf32, #tpu.memory_space<vmem>>, vector<1x1x64xf32>
    %167 = vector.shape_cast %166 : vector<1x1x64xf32> to vector<1x64xf32>
    %168 = vector.broadcast %167 : vector<1x64xf32> to vector<16x64xf32>
    %169 = arith.addf %165, %168 : vector<16x64xf32>
    %170 = arith.addf %169, %140 : vector<16x64xf32>
    %c0_81 = arith.constant 0 : index
    %c0_82 = arith.constant 0 : index
    %c0_83 = arith.constant 0 : index
    %171 = vector.load %arg19[%c0_81, %c0_82, %c0_83] : memref<1x1x64xf32, #tpu.memory_space<vmem>>, vector<1x1x64xf32>
    %172 = vector.shape_cast %171 : vector<1x1x64xf32> to vector<1x64xf32>
    %c0_84 = arith.constant 0 : index
    %c0_85 = arith.constant 0 : index
    %c0_86 = arith.constant 0 : index
    %173 = vector.load %arg20[%c0_84, %c0_85, %c0_86] : memref<1x1x64xf32, #tpu.memory_space<vmem>>, vector<1x1x64xf32>
    %174 = vector.shape_cast %173 : vector<1x1x64xf32> to vector<1x64xf32>
    %cst_87 = arith.constant dense<0.000000e+00> : vector<16xf32>
    %175 = vector.multi_reduction <add>, %170, %cst_87 [1] : vector<16x64xf32> to vector<16xf32>
    %176 = vector.shape_cast %175 : vector<16xf32> to vector<16x1xf32>
    %cst_88 = arith.constant 6.400000e+01 : f32
    %177 = vector.broadcast %cst_88 : f32 to vector<16x1xf32>
    %178 = arith.divf %176, %177 : vector<16x1xf32>
    %179 = vector.broadcast %178 : vector<16x1xf32> to vector<16x64xf32>
    %180 = arith.subf %170, %179 : vector<16x64xf32>
    %181 = arith.mulf %180, %180 : vector<16x64xf32>
    %cst_89 = arith.constant dense<0.000000e+00> : vector<16xf32>
    %182 = vector.multi_reduction <add>, %181, %cst_89 [1] : vector<16x64xf32> to vector<16xf32>
    %183 = vector.shape_cast %182 : vector<16xf32> to vector<16x1xf32>
    %cst_90 = arith.constant 6.400000e+01 : f32
    %184 = vector.broadcast %cst_90 : f32 to vector<16x1xf32>
    %185 = arith.divf %183, %184 : vector<16x1xf32>
    %cst_91 = arith.constant 9.99999996E-13 : f32
    %186 = vector.broadcast %cst_91 : f32 to vector<16x1xf32>
    %187 = arith.addf %185, %186 : vector<16x1xf32>
    %188 = math.rsqrt %187 : vector<16x1xf32>
    %189 = vector.broadcast %188 : vector<16x1xf32> to vector<16x64xf32>
    %190 = arith.mulf %180, %189 : vector<16x64xf32>
    %191 = vector.broadcast %172 : vector<1x64xf32> to vector<16x64xf32>
    %192 = arith.mulf %190, %191 : vector<16x64xf32>
    %193 = vector.broadcast %174 : vector<1x64xf32> to vector<16x64xf32>
    %194 = arith.addf %192, %193 : vector<16x64xf32>
    %195 = vector.shape_cast %194 : vector<16x64xf32> to vector<1x16x64xf32>
    %c0_92 = arith.constant 0 : index
    %c0_93 = arith.constant 0 : index
    %c0_94 = arith.constant 0 : index
    %196 = vector.load %arg22[%c0_92, %c0_93, %c0_94] : memref<1x16x64xf32, #tpu.memory_space<vmem>>, vector<1x16x64xf32>
    tpu.vector_store %arg22[%c0_92, %c0_93, %c0_94], %195 {strides = array<i32>} : memref<1x16x64xf32, #tpu.memory_space<vmem>>, vector<1x16x64xf32>,
    %197 = vector.shape_cast %194 : vector<16x64xf32> to vector<1x1x16x64xf32>
    %c0_95 = arith.constant 0 : index
    %c0_96 = arith.constant 0 : index
    %c0_97 = arith.constant 0 : index
    %c0_98 = arith.constant 0 : index
    %198 = vector.load %arg21[%c0_95, %c0_96, %c0_97, %c0_98] : memref<1x1x16x64xf32, #tpu.memory_space<vmem>>, vector<1x1x16x64xf32>
    tpu.vector_store %arg21[%c0_95, %c0_96, %c0_97, %c0_98], %197 {strides = array<i32>} : memref<1x1x16x64xf32, #tpu.memory_space<vmem>>, vector<1x1x16x64xf32>,
    return
  }
  func.func @transform_0(%arg0: i32, %arg1: i32) -> (i32, i32, i32) {
    %c0_i32 = arith.constant 0 : i32
    %c0_i32_0 = arith.constant 0 : i32
    %c0_i32_1 = arith.constant 0 : i32
    return %arg0, %c0_i32, %c0_i32_0 : i32, i32, i32
  }
  func.func @transform_1(%arg0: i32, %arg1: i32) -> (i32, i32, i32) {
    %c0_i32 = arith.constant 0 : i32
    %c0_i32_0 = arith.constant 0 : i32
    %c0_i32_1 = arith.constant 0 : i32
    return %arg0, %c0_i32, %c0_i32_0 : i32, i32, i32
  }
  func.func @transform_2(%arg0: i32, %arg1: i32) -> (i32, i32, i32) {
    %c0_i32 = arith.constant 0 : i32
    %c0_i32_0 = arith.constant 0 : i32
    %c0_i32_1 = arith.constant 0 : i32
    return %arg0, %c0_i32, %c0_i32_0 : i32, i32, i32
  }
  func.func @transform_3(%arg0: i32, %arg1: i32) -> (i32, i32, i32) {
    %c0_i32 = arith.constant 0 : i32
    %c0_i32_0 = arith.constant 0 : i32
    %c0_i32_1 = arith.constant 0 : i32
    return %arg1, %c0_i32, %c0_i32_0 : i32, i32, i32
  }
  func.func @transform_4(%arg0: i32, %arg1: i32) -> (i32, i32, i32) {
    %c0_i32 = arith.constant 0 : i32
    %c0_i32_0 = arith.constant 0 : i32
    %c0_i32_1 = arith.constant 0 : i32
    return %arg1, %c0_i32, %c0_i32_0 : i32, i32, i32
  }
  func.func @transform_5(%arg0: i32, %arg1: i32) -> (i32, i32, i32) {
    %c0_i32 = arith.constant 0 : i32
    %c0_i32_0 = arith.constant 0 : i32
    %c0_i32_1 = arith.constant 0 : i32
    return %arg1, %c0_i32, %c0_i32_0 : i32, i32, i32
  }
  func.func @transform_6(%arg0: i32, %arg1: i32) -> (i32, i32, i32) {
    %c0_i32 = arith.constant 0 : i32
    %c0_i32_0 = arith.constant 0 : i32
    %c0_i32_1 = arith.constant 0 : i32
    return %arg1, %c0_i32, %c0_i32_0 : i32, i32, i32
  }
  func.func @transform_7(%arg0: i32, %arg1: i32) -> (i32, i32, i32) {
    %c0_i32 = arith.constant 0 : i32
    %c0_i32_0 = arith.constant 0 : i32
    %c0_i32_1 = arith.constant 0 : i32
    return %arg1, %c0_i32, %c0_i32_0 : i32, i32, i32
  }
  func.func @transform_8(%arg0: i32, %arg1: i32) -> (i32, i32, i32) {
    %c0_i32 = arith.constant 0 : i32
    %c0_i32_0 = arith.constant 0 : i32
    %c0_i32_1 = arith.constant 0 : i32
    return %arg1, %c0_i32, %c0_i32_0 : i32, i32, i32
  }
  func.func @transform_9(%arg0: i32, %arg1: i32) -> (i32, i32, i32) {
    %c0_i32 = arith.constant 0 : i32
    %c0_i32_0 = arith.constant 0 : i32
    %c0_i32_1 = arith.constant 0 : i32
    return %arg1, %c0_i32, %c0_i32_0 : i32, i32, i32
  }
  func.func @transform_10(%arg0: i32, %arg1: i32) -> (i32, i32, i32) {
    %c0_i32 = arith.constant 0 : i32
    %c0_i32_0 = arith.constant 0 : i32
    %c0_i32_1 = arith.constant 0 : i32
    return %arg1, %c0_i32, %c0_i32_0 : i32, i32, i32
  }
  func.func @transform_11(%arg0: i32, %arg1: i32) -> (i32, i32, i32) {
    %c0_i32 = arith.constant 0 : i32
    %c0_i32_0 = arith.constant 0 : i32
    %c0_i32_1 = arith.constant 0 : i32
    return %arg1, %c0_i32, %c0_i32_0 : i32, i32, i32
  }
  func.func @transform_12(%arg0: i32, %arg1: i32) -> (i32, i32, i32) {
    %c0_i32 = arith.constant 0 : i32
    %c0_i32_0 = arith.constant 0 : i32
    %c0_i32_1 = arith.constant 0 : i32
    return %arg1, %c0_i32, %c0_i32_0 : i32, i32, i32
  }
  func.func @transform_13(%arg0: i32, %arg1: i32) -> (i32, i32, i32) {
    %c0_i32 = arith.constant 0 : i32
    %c0_i32_0 = arith.constant 0 : i32
    %c0_i32_1 = arith.constant 0 : i32
    return %arg1, %c0_i32, %c0_i32_0 : i32, i32, i32
  }
  func.func @transform_14(%arg0: i32, %arg1: i32) -> (i32, i32, i32) {
    %c0_i32 = arith.constant 0 : i32
    %c0_i32_0 = arith.constant 0 : i32
    %c0_i32_1 = arith.constant 0 : i32
    return %arg1, %c0_i32, %c0_i32_0 : i32, i32, i32
  }
  func.func @transform_15(%arg0: i32, %arg1: i32) -> (i32, i32, i32) {
    %c0_i32 = arith.constant 0 : i32
    %c0_i32_0 = arith.constant 0 : i32
    %c0_i32_1 = arith.constant 0 : i32
    return %arg1, %c0_i32, %c0_i32_0 : i32, i32, i32
  }
  func.func @transform_16(%arg0: i32, %arg1: i32) -> (i32, i32, i32) {
    %c0_i32 = arith.constant 0 : i32
    %c0_i32_0 = arith.constant 0 : i32
    %c0_i32_1 = arith.constant 0 : i32
    return %arg1, %c0_i32, %c0_i32_0 : i32, i32, i32
  }
  func.func @transform_17(%arg0: i32, %arg1: i32) -> (i32, i32, i32) {
    %c0_i32 = arith.constant 0 : i32
    %c0_i32_0 = arith.constant 0 : i32
    %c0_i32_1 = arith.constant 0 : i32
    return %arg1, %c0_i32, %c0_i32_0 : i32, i32, i32
  }
  func.func @transform_18(%arg0: i32, %arg1: i32) -> (i32, i32, i32) {
    %c0_i32 = arith.constant 0 : i32
    %c0_i32_0 = arith.constant 0 : i32
    %c0_i32_1 = arith.constant 0 : i32
    return %arg1, %c0_i32, %c0_i32_0 : i32, i32, i32
  }
  func.func @transform_19(%arg0: i32, %arg1: i32) -> (i32, i32, i32, i32) {
    %c0_i32 = arith.constant 0 : i32
    %c0_i32_0 = arith.constant 0 : i32
    %c0_i32_1 = arith.constant 0 : i32
    return %arg1, %arg0, %c0_i32, %c0_i32_0 : i32, i32, i32, i32
  }
}

</mosaic_0001>

<llo_original>
// kernel: roberta_cross_encoder.1
$region0: #{roberta_cross_encoder.1}
  #allocation0 [shape = 'u32[]', space=smem, size = 0x4, offset = 0x4, fixed_abs, tag = 'smem constant byte address 0x4 - core index']
  #allocation1 [shape = 'u32[144,128]{1,0:T(1,128)}', space=vmem, size = 0x12000, scoped, tag = 'internal scratch']
  #allocation2 [shape = 'f32[1,16,64]{2,1,0:T(8,128)}', space=vmem, size = 0x2000, scoped, tag = 'scratch operand']
  %s0 = inlined_call_operand.vmem [shape: f32[2,16,64], index: 0, kind: input, shape index: {}]
  %s1 = inlined_call_operand.vmem [shape: f32[2,8,64], index: 1, kind: input, shape index: {}]
  %s2 = inlined_call_operand.vmem [shape: f32[2,1,8], index: 2, kind: input, shape index: {}]
  %s3 = inlined_call_operand.vmem [shape: bf16[2,64,64], index: 3, kind: input, shape index: {}]
  %s4 = inlined_call_operand.vmem [shape: f32[2,1,64], index: 4, kind: input, shape index: {}]
  %s5 = inlined_call_operand.vmem [shape: bf16[2,64,64], index: 5, kind: input, shape index: {}]
  %s6 = inlined_call_operand.vmem [shape: f32[2,1,64], index: 6, kind: input, shape index: {}]
  %s7 = inlined_call_operand.vmem [shape: bf16[2,64,64], index: 7, kind: input, shape index: {}]
  %s8 = inlined_call_operand.vmem [shape: f32[2,1,64], index: 8, kind: input, shape index: {}]
  %s9 = inlined_call_operand.vmem [shape: bf16[2,64,64], index: 9, kind: input, shape index: {}]
  %s10 = inlined_call_operand.vmem [shape: f32[2,1,64], index: 10, kind: input, shape index: {}]
  %s11 = inlined_call_operand.vmem [shape: f32[2,1,64], index: 11, kind: input, shape index: {}]
  %s12 = inlined_call_operand.vmem [shape: f32[2,1,64], index: 12, kind: input, shape index: {}]
  %s13 = inlined_call_operand.vmem [shape: bf16[2,64,256], index: 13, kind: input, shape index: {}]
  %s14 = inlined_call_operand.vmem [shape: f32[2,1,256], index: 14, kind: input, shape index: {}]
  %s15 = inlined_call_operand.vmem [shape: bf16[2,256,64], index: 15, kind: input, shape index: {}]
  %s16 = inlined_call_operand.vmem [shape: f32[2,1,64], index: 16, kind: input, shape index: {}]
  %s17 = inlined_call_operand.vmem [shape: f32[2,1,64], index: 17, kind: input, shape index: {}]
  %s18 = inlined_call_operand.vmem [shape: f32[2,1,64], index: 18, kind: input, shape index: {}]
  %s19 = inlined_call_operand.hbm [shape: f32[2,2,16,64], index: 19, kind: output, shape index: {}]
  %s20 = sld [smem:[#allocation0]]
  $region113: #{roberta_cross_encoder.1} parent=0
    _
  %s22 = ssub.s32 1, %s20
  %s23 = scalar_select 0, %s22, %s20
  $region1: #{roberta_cross_encoder.1} parent=0
    #allocation3 [shape = 'u8[16384]{0}', space=vmem, size = 0x4000, scoped, tag = 'output window, operand 0']
    #allocation4 [shape = 's32[2]{0}', space=sflag, size = 0x8, scoped, tag = 'scoped memory for roberta_cross_encoder.1']
    %24 = vsyncpa [#allocation4], 0
    %s25 = scalar_lea.sflag [#allocation4], 1
    %26 = vsyncpa %s25, 0
    loop: start=0, step=1, limit=6
    $region2: #{roberta_cross_encoder.1} parent=1 // loop_pre_header
      _
    $region3: #{roberta_cross_encoder.1} parent=1 // loop_header
      %s28 = sphi 0, %s32
      %p29 = scmp.ge.s32.totalorder %s28, 6
      %s35 = sphi 0, %s47
      %s36 = sphi 0, %s43
      %s37 = sphi 0, %s35
      %s38 = sphi 0, %s36
      %s39 = sphi 0, %s37
      %s40 = sphi 0, %s38
      %s50 = sphi 0, %s52
      %s53 = sphi 0, %s50
      %s54 = sphi 0, %s53
      %s70 = sphi 0, %s54
      %s76 = sphi 0, %s78
      %s79 = sphi 0, %s76
      %s80 = sphi 0, %s79
      %s96 = sphi 0, %s80
      %s102 = sphi 0, %s104
      %s105 = sphi 0, %s102
      %s106 = sphi 0, %s105
      %s122 = sphi 0, %s106
      %s128 = sphi 0, %s130
      %s131 = sphi 0, %s128
      %s132 = sphi 0, %s131
      %s148 = sphi 0, %s132
      %s154 = sphi 0, %s156
      %s157 = sphi 0, %s154
      %s158 = sphi 0, %s157
      %s174 = sphi 0, %s158
      %s180 = sphi 0, %s182
      %s183 = sphi 0, %s180
      %s184 = sphi 0, %s183
      %s200 = sphi 0, %s184
      %s206 = sphi 0, %s208
      %s209 = sphi 0, %s206
      %s210 = sphi 0, %s209
      %s226 = sphi 0, %s210
      %s232 = sphi 0, %s234
      %s235 = sphi 0, %s232
      %s236 = sphi 0, %s235
      %s252 = sphi 0, %s236
      %s258 = sphi 0, %s260
      %s261 = sphi 0, %s258
      %s262 = sphi 0, %s261
      %s278 = sphi 0, %s262
      %s284 = sphi 0, %s286
      %s287 = sphi 0, %s284
      %s288 = sphi 0, %s287
      %s304 = sphi 0, %s288
      %s310 = sphi 0, %s312
      %s313 = sphi 0, %s310
      %s314 = sphi 0, %s313
      %s330 = sphi 0, %s314
      %s336 = sphi 0, %s338
      %s339 = sphi 0, %s336
      %s340 = sphi 0, %s339
      %s356 = sphi 0, %s340
      %s362 = sphi 0, %s364
      %s365 = sphi 0, %s362
      %s366 = sphi 0, %s365
      %s382 = sphi 0, %s366
      %s388 = sphi 0, %s390
      %s391 = sphi 0, %s388
      %s392 = sphi 0, %s391
      %s408 = sphi 0, %s392
      %s414 = sphi 0, %s416
      %s417 = sphi 0, %s414
      %s418 = sphi 0, %s417
      %s434 = sphi 0, %s418
      %s440 = sphi 0, %s442
      %s443 = sphi 0, %s440
      %s444 = sphi 0, %s443
      %s460 = sphi 0, %s444
      %s466 = sphi 0, %s468
      %s469 = sphi 0, %s466
      %s470 = sphi 0, %s469
      %s486 = sphi 0, %s470
      %s492 = sphi 0, %s494
      %s495 = sphi 0, %s492
      %s496 = sphi 0, %s495
      %s512 = sphi 0, %s496
      %s518 = sphi 0, %s520
      %s521 = sphi 0, %s518
      %s522 = sphi 0, %s521
      %s538 = sphi 0, %s522
      %s546 = sphi 0, %s548
      %s549 = sphi 0, %s546
      %s550 = sphi 0, %s549
      %s566 = sphi 0, %s550
    $region4: #{roberta_cross_encoder.1} parent=1 // loop_header_branch
      %31 = sbr.rel (%p29) target = $region8
    $region5: #{roberta_cross_encoder.1} parent=1 // loop_body
      %s33 = ssub.s32 %s28, 1
      %s34 = ssub.s32 %s28, 2
      %s41 = sadd.s32 1, %s36
      %p42 = scmp.ge.s32.totalorder %s41, 2
      %s43 = scalar_select %p42, 0, %s41
      %s44 = sadd.s32 1, %s35
      %s45 = scalar_select %p42, %s44, %s35
      %p46 = scmp.ge.s32.totalorder %s45, 2
      %s47 = scalar_select %p46, 0, %s45
      %s48 = ssub.s32 %s35, %s47
      %p49 = scmp.eq.s32.totalorder %s48, 0
      %s51 = sadd.s32 %s50, 1
      %s52 = scalar_select %p49, %s50, %s51
      %p55 = pneg %p49
      %p56 = scmp.eq.s32.totalorder %s28, 3
      %p57 = por %p55, %p56
      %p58 = scmp.ne.s32.totalorder %s50, %s53
      %p59 = scmp.eq.s32.totalorder %s28, 0
      %p60 = por %p58, %p59
      %p61 = scmp.ne.s32.totalorder %s50, %s53
      %p62 = scmp.eq.s32.totalorder %s33, 3
      %p63 = por %p61, %p62
      %p64 = scmp.ne.s32.totalorder %s53, %s54
      %p65 = scmp.eq.s32.totalorder %s33, 0
      %p66 = por %p64, %p65
      %p67 = scmp.ne.s32.totalorder %s53, %s54
      %p68 = scmp.eq.s32.totalorder %s34, 3
      %p69 = por %p67, %p68
      %p71 = scmp.ne.s32.totalorder %s54, %s70
      %p72 = scmp.eq.s32.totalorder %s34, 0
      %p73 = por %p71, %p72
      %s74 = ssub.s32 %s35, %s47
      %p75 = scmp.eq.s32.totalorder %s74, 0
      %s77 = sadd.s32 %s76, 1
      %s78 = scalar_select %p75, %s76, %s77
      %p81 = pneg %p75
      %p82 = scmp.eq.s32.totalorder %s28, 3
      %p83 = por %p81, %p82
      %p84 = scmp.ne.s32.totalorder %s76, %s79
      %p85 = scmp.eq.s32.totalorder %s28, 0
      %p86 = por %p84, %p85
      %p87 = scmp.ne.s32.totalorder %s76, %s79
      %p88 = scmp.eq.s32.totalorder %s33, 3
      %p89 = por %p87, %p88
      %p90 = scmp.ne.s32.totalorder %s79, %s80
      %p91 = scmp.eq.s32.totalorder %s33, 0
      %p92 = por %p90, %p91
      %p93 = scmp.ne.s32.totalorder %s79, %s80
      %p94 = scmp.eq.s32.totalorder %s34, 3
      %p95 = por %p93, %p94
      %p97 = scmp.ne.s32.totalorder %s80, %s96
      %p98 = scmp.eq.s32.totalorder %s34, 0
      %p99 = por %p97, %p98
      %s100 = ssub.s32 %s35, %s47
      %p101 = scmp.eq.s32.totalorder %s100, 0
      %s103 = sadd.s32 %s102, 1
      %s104 = scalar_select %p101, %s102, %s103
      %p107 = pneg %p101
      %p108 = scmp.eq.s32.totalorder %s28, 3
      %p109 = por %p107, %p108
      %p110 = scmp.ne.s32.totalorder %s102, %s105
      %p111 = scmp.eq.s32.totalorder %s28, 0
      %p112 = por %p110, %p111
      %p113 = scmp.ne.s32.totalorder %s102, %s105
      %p114 = scmp.eq.s32.totalorder %s33, 3
      %p115 = por %p113, %p114
      %p116 = scmp.ne.s32.totalorder %s105, %s106
      %p117 = scmp.eq.s32.totalorder %s33, 0
      %p118 = por %p116, %p117
      %p119 = scmp.ne.s32.totalorder %s105, %s106
      %p120 = scmp.eq.s32.totalorder %s34, 3
      %p121 = por %p119, %p120
      %p123 = scmp.ne.s32.totalorder %s106, %s122
      %p124 = scmp.eq.s32.totalorder %s34, 0
      %p125 = por %p123, %p124
      %s126 = ssub.s32 %s36, %s43
      %p127 = scmp.eq.s32.totalorder %s126, 0
      %s129 = sadd.s32 %s128, 1
      %s130 = scalar_select %p127, %s128, %s129
      %p133 = pneg %p127
      %p134 = scmp.eq.s32.totalorder %s28, 3
      %p135 = por %p133, %p134
      %p136 = scmp.ne.s32.totalorder %s128, %s131
      %p137 = scmp.eq.s32.totalorder %s28, 0
      %p138 = por %p136, %p137
      %p139 = scmp.ne.s32.totalorder %s128, %s131
      %p140 = scmp.eq.s32.totalorder %s33, 3
      %p141 = por %p139, %p140
      %p142 = scmp.ne.s32.totalorder %s131, %s132
      %p143 = scmp.eq.s32.totalorder %s33, 0
      %p144 = por %p142, %p143
      %p145 = scmp.ne.s32.totalorder %s131, %s132
      %p146 = scmp.eq.s32.totalorder %s34, 3
      %p147 = por %p145, %p146
      %p149 = scmp.ne.s32.totalorder %s132, %s148
      %p150 = scmp.eq.s32.totalorder %s34, 0
      %p151 = por %p149, %p150
      %s152 = ssub.s32 %s36, %s43
      %p153 = scmp.eq.s32.totalorder %s152, 0
      %s155 = sadd.s32 %s154, 1
      %s156 = scalar_select %p153, %s154, %s155
      %p159 = pneg %p153
      %p160 = scmp.eq.s32.totalorder %s28, 3
      %p161 = por %p159, %p160
      %p162 = scmp.ne.s32.totalorder %s154, %s157
      %p163 = scmp.eq.s32.totalorder %s28, 0
      %p164 = por %p162, %p163
      %p165 = scmp.ne.s32.totalorder %s154, %s157
      %p166 = scmp.eq.s32.totalorder %s33, 3
      %p167 = por %p165, %p166
      %p168 = scmp.ne.s32.totalorder %s157, %s158
      %p169 = scmp.eq.s32.totalorder %s33, 0
      %p170 = por %p168, %p169
      %p171 = scmp.ne.s32.totalorder %s157, %s158
      %p172 = scmp.eq.s32.totalorder %s34, 3
      %p173 = por %p171, %p172
      %p175 = scmp.ne.s32.totalorder %s158, %s174
      %p176 = scmp.eq.s32.totalorder %s34, 0
      %p177 = por %p175, %p176
      %s178 = ssub.s32 %s36, %s43
      %p179 = scmp.eq.s32.totalorder %s178, 0
      %s181 = sadd.s32 %s180, 1
      %s182 = scalar_select %p179, %s180, %s181
      %p185 = pneg %p179
      %p186 = scmp.eq.s32.totalorder %s28, 3
      %p187 = por %p185, %p186
      %p188 = scmp.ne.s32.totalorder %s180, %s183
      %p189 = scmp.eq.s32.totalorder %s28, 0
      %p190 = por %p188, %p189
      %p191 = scmp.ne.s32.totalorder %s180, %s183
      %p192 = scmp.eq.s32.totalorder %s33, 3
      %p193 = por %p191, %p192
      %p194 = scmp.ne.s32.totalorder %s183, %s184
      %p195 = scmp.eq.s32.totalorder %s33, 0
      %p196 = por %p194, %p195
      %p197 = scmp.ne.s32.totalorder %s183, %s184
      %p198 = scmp.eq.s32.totalorder %s34, 3
      %p199 = por %p197, %p198
      %p201 = scmp.ne.s32.totalorder %s184, %s200
      %p202 = scmp.eq.s32.totalorder %s34, 0
      %p203 = por %p201, %p202
      %s204 = ssub.s32 %s36, %s43
      %p205 = scmp.eq.s32.totalorder %s204, 0
      %s207 = sadd.s32 %s206, 1
      %s208 = scalar_select %p205, %s206, %s207
      %p211 = pneg %p205
      %p212 = scmp.eq.s32.totalorder %s28, 3
      %p213 = por %p211, %p212
      %p214 = scmp.ne.s32.totalorder %s206, %s209
      %p215 = scmp.eq.s32.totalorder %s28, 0
      %p216 = por %p214, %p215
      %p217 = scmp.ne.s32.totalorder %s206, %s209
      %p218 = scmp.eq.s32.totalorder %s33, 3
      %p219 = por %p217, %p218
      %p220 = scmp.ne.s32.totalorder %s209, %s210
      %p221 = scmp.eq.s32.totalorder %s33, 0
      %p222 = por %p220, %p221
      %p223 = scmp.ne.s32.totalorder %s209, %s210
      %p224 = scmp.eq.s32.totalorder %s34, 3
      %p225 = por %p223, %p224
      %p227 = scmp.ne.s32.totalorder %s210, %s226
      %p228 = scmp.eq.s32.totalorder %s34, 0
      %p229 = por %p227, %p228
      %s230 = ssub.s32 %s36, %s43
      %p231 = scmp.eq.s32.totalorder %s230, 0
      %s233 = sadd.s32 %s232, 1
      %s234 = scalar_select %p231, %s232, %s233
      %p237 = pneg %p231
      %p238 = scmp.eq.s32.totalorder %s28, 3
      %p239 = por %p237, %p238
      %p240 = scmp.ne.s32.totalorder %s232, %s235
      %p241 = scmp.eq.s32.totalorder %s28, 0
      %p242 = por %p240, %p241
      %p243 = scmp.ne.s32.totalorder %s232, %s235
      %p244 = scmp.eq.s32.totalorder %s33, 3
      %p245 = por %p243, %p244
      %p246 = scmp.ne.s32.totalorder %s235, %s236
      %p247 = scmp.eq.s32.totalorder %s33, 0
      %p248 = por %p246, %p247
      %p249 = scmp.ne.s32.totalorder %s235, %s236
      %p250 = scmp.eq.s32.totalorder %s34, 3
      %p251 = por %p249, %p250
      %p253 = scmp.ne.s32.totalorder %s236, %s252
      %p254 = scmp.eq.s32.totalorder %s34, 0
      %p255 = por %p253, %p254
      %s256 = ssub.s32 %s36, %s43
      %p257 = scmp.eq.s32.totalorder %s256, 0
      %s259 = sadd.s32 %s258, 1
      %s260 = scalar_select %p257, %s258, %s259
      %p263 = pneg %p257
      %p264 = scmp.eq.s32.totalorder %s28, 3
      %p265 = por %p263, %p264
      %p266 = scmp.ne.s32.totalorder %s258, %s261
      %p267 = scmp.eq.s32.totalorder %s28, 0
      %p268 = por %p266, %p267
      %p269 = scmp.ne.s32.totalorder %s258, %s261
      %p270 = scmp.eq.s32.totalorder %s33, 3
      %p271 = por %p269, %p270
      %p272 = scmp.ne.s32.totalorder %s261, %s262
      %p273 = scmp.eq.s32.totalorder %s33, 0
      %p274 = por %p272, %p273
      %p275 = scmp.ne.s32.totalorder %s261, %s262
      %p276 = scmp.eq.s32.totalorder %s34, 3
      %p277 = por %p275, %p276
      %p279 = scmp.ne.s32.totalorder %s262, %s278
      %p280 = scmp.eq.s32.totalorder %s34, 0
      %p281 = por %p279, %p280
      %s282 = ssub.s32 %s36, %s43
      %p283 = scmp.eq.s32.totalorder %s282, 0
      %s285 = sadd.s32 %s284, 1
      %s286 = scalar_select %p283, %s284, %s285
      %p289 = pneg %p283
      %p290 = scmp.eq.s32.totalorder %s28, 3
      %p291 = por %p289, %p290
      %p292 = scmp.ne.s32.totalorder %s284, %s287
      %p293 = scmp.eq.s32.totalorder %s28, 0
      %p294 = por %p292, %p293
      %p295 = scmp.ne.s32.totalorder %s284, %s287
      %p296 = scmp.eq.s32.totalorder %s33, 3
      %p297 = por %p295, %p296
      %p298 = scmp.ne.s32.totalorder %s287, %s288
      %p299 = scmp.eq.s32.totalorder %s33, 0
      %p300 = por %p298, %p299
      %p301 = scmp.ne.s32.totalorder %s287, %s288
      %p302 = scmp.eq.s32.totalorder %s34, 3
      %p303 = por %p301, %p302
      %p305 = scmp.ne.s32.totalorder %s288, %s304
      %p306 = scmp.eq.s32.totalorder %s34, 0
      %p307 = por %p305, %p306
      %s308 = ssub.s32 %s36, %s43
      %p309 = scmp.eq.s32.totalorder %s308, 0
      %s311 = sadd.s32 %s310, 1
      %s312 = scalar_select %p309, %s310, %s311
      %p315 = pneg %p309
      %p316 = scmp.eq.s32.totalorder %s28, 3
      %p317 = por %p315, %p316
      %p318 = scmp.ne.s32.totalorder %s310, %s313
      %p319 = scmp.eq.s32.totalorder %s28, 0
      %p320 = por %p318, %p319
      %p321 = scmp.ne.s32.totalorder %s310, %s313
      %p322 = scmp.eq.s32.totalorder %s33, 3
      %p323 = por %p321, %p322
      %p324 = scmp.ne.s32.totalorder %s313, %s314
      %p325 = scmp.eq.s32.totalorder %s33, 0
      %p326 = por %p324, %p325
      %p327 = scmp.ne.s32.totalorder %s313, %s314
      %p328 = scmp.eq.s32.totalorder %s34, 3
      %p329 = por %p327, %p328
      %p331 = scmp.ne.s32.totalorder %s314, %s330
      %p332 = scmp.eq.s32.totalorder %s34, 0
      %p333 = por %p331, %p332
      %s334 = ssub.s32 %s36, %s43
      %p335 = scmp.eq.s32.totalorder %s334, 0
      %s337 = sadd.s32 %s336, 1
      %s338 = scalar_select %p335, %s336, %s337
      %p341 = pneg %p335
      %p342 = scmp.eq.s32.totalorder %s28, 3
      %p343 = por %p341, %p342
      %p344 = scmp.ne.s32.totalorder %s336, %s339
      %p345 = scmp.eq.s32.totalorder %s28, 0
      %p346 = por %p344, %p345
      %p347 = scmp.ne.s32.totalorder %s336, %s339
      %p348 = scmp.eq.s32.totalorder %s33, 3
      %p349 = por %p347, %p348
      %p350 = scmp.ne.s32.totalorder %s339, %s340
      %p351 = scmp.eq.s32.totalorder %s33, 0
      %p352 = por %p350, %p351
      %p353 = scmp.ne.s32.totalorder %s339, %s340
      %p354 = scmp.eq.s32.totalorder %s34, 3
      %p355 = por %p353, %p354
      %p357 = scmp.ne.s32.totalorder %s340, %s356
      %p358 = scmp.eq.s32.totalorder %s34, 0
      %p359 = por %p357, %p358
      %s360 = ssub.s32 %s36, %s43
      %p361 = scmp.eq.s32.totalorder %s360, 0
      %s363 = sadd.s32 %s362, 1
      %s364 = scalar_select %p361, %s362, %s363
      %p367 = pneg %p361
      %p368 = scmp.eq.s32.totalorder %s28, 3
      %p369 = por %p367, %p368
      %p370 = scmp.ne.s32.totalorder %s362, %s365
      %p371 = scmp.eq.s32.totalorder %s28, 0
      %p372 = por %p370, %p371
      %p373 = scmp.ne.s32.totalorder %s362, %s365
      %p374 = scmp.eq.s32.totalorder %s33, 3
      %p375 = por %p373, %p374
      %p376 = scmp.ne.s32.totalorder %s365, %s366
      %p377 = scmp.eq.s32.totalorder %s33, 0
      %p378 = por %p376, %p377
      %p379 = scmp.ne.s32.totalorder %s365, %s366
      %p380 = scmp.eq.s32.totalorder %s34, 3
      %p381 = por %p379, %p380
      %p383 = scmp.ne.s32.totalorder %s366, %s382
      %p384 = scmp.eq.s32.totalorder %s34, 0
      %p385 = por %p383, %p384
      %s386 = ssub.s32 %s36, %s43
      %p387 = scmp.eq.s32.totalorder %s386, 0
      %s389 = sadd.s32 %s388, 1
      %s390 = scalar_select %p387, %s388, %s389
      %p393 = pneg %p387
      %p394 = scmp.eq.s32.totalorder %s28, 3
      %p395 = por %p393, %p394
      %p396 = scmp.ne.s32.totalorder %s388, %s391
      %p397 = scmp.eq.s32.totalorder %s28, 0
      %p398 = por %p396, %p397
      %p399 = scmp.ne.s32.totalorder %s388, %s391
      %p400 = scmp.eq.s32.totalorder %s33, 3
      %p401 = por %p399, %p400
      %p402 = scmp.ne.s32.totalorder %s391, %s392
      %p403 = scmp.eq.s32.totalorder %s33, 0
      %p404 = por %p402, %p403
      %p405 = scmp.ne.s32.totalorder %s391, %s392
      %p406 = scmp.eq.s32.totalorder %s34, 3
      %p407 = por %p405, %p406
      %p409 = scmp.ne.s32.totalorder %s392, %s408
      %p410 = scmp.eq.s32.totalorder %s34, 0
      %p411 = por %p409, %p410
      %s412 = ssub.s32 %s36, %s43
      %p413 = scmp.eq.s32.totalorder %s412, 0
      %s415 = sadd.s32 %s414, 1
      %s416 = scalar_select %p413, %s414, %s415
      %p419 = pneg %p413
      %p420 = scmp.eq.s32.totalorder %s28, 3
      %p421 = por %p419, %p420
      %p422 = scmp.ne.s32.totalorder %s414, %s417
      %p423 = scmp.eq.s32.totalorder %s28, 0
      %p424 = por %p422, %p423
      %p425 = scmp.ne.s32.totalorder %s414, %s417
      %p426 = scmp.eq.s32.totalorder %s33, 3
      %p427 = por %p425, %p426
      %p428 = scmp.ne.s32.totalorder %s417, %s418
      %p429 = scmp.eq.s32.totalorder %s33, 0
      %p430 = por %p428, %p429
      %p431 = scmp.ne.s32.totalorder %s417, %s418
      %p432 = scmp.eq.s32.totalorder %s34, 3
      %p433 = por %p431, %p432
      %p435 = scmp.ne.s32.totalorder %s418, %s434
      %p436 = scmp.eq.s32.totalorder %s34, 0
      %p437 = por %p435, %p436
      %s438 = ssub.s32 %s36, %s43
      %p439 = scmp.eq.s32.totalorder %s438, 0
      %s441 = sadd.s32 %s440, 1
      %s442 = scalar_select %p439, %s440, %s441
      %p445 = pneg %p439
      %p446 = scmp.eq.s32.totalorder %s28, 3
      %p447 = por %p445, %p446
      %p448 = scmp.ne.s32.totalorder %s440, %s443
      %p449 = scmp.eq.s32.totalorder %s28, 0
      %p450 = por %p448, %p449
      %p451 = scmp.ne.s32.totalorder %s440, %s443
      %p452 = scmp.eq.s32.totalorder %s33, 3
      %p453 = por %p451, %p452
      %p454 = scmp.ne.s32.totalorder %s443, %s444
      %p455 = scmp.eq.s32.totalorder %s33, 0
      %p456 = por %p454, %p455
      %p457 = scmp.ne.s32.totalorder %s443, %s444
      %p458 = scmp.eq.s32.totalorder %s34, 3
      %p459 = por %p457, %p458
      %p461 = scmp.ne.s32.totalorder %s444, %s460
      %p462 = scmp.eq.s32.totalorder %s34, 0
      %p463 = por %p461, %p462
      %s464 = ssub.s32 %s36, %s43
      %p465 = scmp.eq.s32.totalorder %s464, 0
      %s467 = sadd.s32 %s466, 1
      %s468 = scalar_select %p465, %s466, %s467
      %p471 = pneg %p465
      %p472 = scmp.eq.s32.totalorder %s28, 3
      %p473 = por %p471, %p472
      %p474 = scmp.ne.s32.totalorder %s466, %s469
      %p475 = scmp.eq.s32.totalorder %s28, 0
      %p476 = por %p474, %p475
      %p477 = scmp.ne.s32.totalorder %s466, %s469
      %p478 = scmp.eq.s32.totalorder %s33, 3
      %p479 = por %p477, %p478
      %p480 = scmp.ne.s32.totalorder %s469, %s470
      %p481 = scmp.eq.s32.totalorder %s33, 0
      %p482 = por %p480, %p481
      %p483 = scmp.ne.s32.totalorder %s469, %s470
      %p484 = scmp.eq.s32.totalorder %s34, 3
      %p485 = por %p483, %p484
      %p487 = scmp.ne.s32.totalorder %s470, %s486
      %p488 = scmp.eq.s32.totalorder %s34, 0
      %p489 = por %p487, %p488
      %s490 = ssub.s32 %s36, %s43
      %p491 = scmp.eq.s32.totalorder %s490, 0
      %s493 = sadd.s32 %s492, 1
      %s494 = scalar_select %p491, %s492, %s493
      %p497 = pneg %p491
      %p498 = scmp.eq.s32.totalorder %s28, 3
      %p499 = por %p497, %p498
      %p500 = scmp.ne.s32.totalorder %s492, %s495
      %p501 = scmp.eq.s32.totalorder %s28, 0
      %p502 = por %p500, %p501
      %p503 = scmp.ne.s32.totalorder %s492, %s495
      %p504 = scmp.eq.s32.totalorder %s33, 3
      %p505 = por %p503, %p504
      %p506 = scmp.ne.s32.totalorder %s495, %s496
      %p507 = scmp.eq.s32.totalorder %s33, 0
      %p508 = por %p506, %p507
      %p509 = scmp.ne.s32.totalorder %s495, %s496
      %p510 = scmp.eq.s32.totalorder %s34, 3
      %p511 = por %p509, %p510
      %p513 = scmp.ne.s32.totalorder %s496, %s512
      %p514 = scmp.eq.s32.totalorder %s34, 0
      %p515 = por %p513, %p514
      %s516 = ssub.s32 %s36, %s43
      %p517 = scmp.eq.s32.totalorder %s516, 0
      %s519 = sadd.s32 %s518, 1
      %s520 = scalar_select %p517, %s518, %s519
      %p523 = pneg %p517
      %p524 = scmp.eq.s32.totalorder %s28, 3
      %p525 = por %p523, %p524
      %p526 = scmp.ne.s32.totalorder %s518, %s521
      %p527 = scmp.eq.s32.totalorder %s28, 0
      %p528 = por %p526, %p527
      %p529 = scmp.ne.s32.totalorder %s518, %s521
      %p530 = scmp.eq.s32.totalorder %s33, 3
      %p531 = por %p529, %p530
      %p532 = scmp.ne.s32.totalorder %s521, %s522
      %p533 = scmp.eq.s32.totalorder %s33, 0
      %p534 = por %p532, %p533
      %p535 = scmp.ne.s32.totalorder %s521, %s522
      %p536 = scmp.eq.s32.totalorder %s34, 3
      %p537 = por %p535, %p536
      %p539 = scmp.ne.s32.totalorder %s522, %s538
      %p540 = scmp.eq.s32.totalorder %s34, 0
      %p541 = por %p539, %p540
      %s542 = ssub.s32 %s36, %s43
      %s543 = ssub.s32 %s35, %s47
      %s544 = sor.u32 %s542, %s543
      %p545 = scmp.eq.s32.totalorder %s544, 0
      %s547 = sadd.s32 %s546, 1
      %s548 = scalar_select %p545, %s546, %s547
      %p551 = pneg %p545
      %p552 = scmp.eq.s32.totalorder %s28, 3
      %p553 = por %p551, %p552
      %p554 = scmp.ne.s32.totalorder %s546, %s549
      %p555 = scmp.eq.s32.totalorder %s28, 0
      %p556 = por %p554, %p555
      %p557 = scmp.ne.s32.totalorder %s546, %s549
      %p558 = scmp.eq.s32.totalorder %s33, 3
      %p559 = por %p557, %p558
      %p560 = scmp.ne.s32.totalorder %s549, %s550
      %p561 = scmp.eq.s32.totalorder %s33, 0
      %p562 = por %p560, %p561
      %p563 = scmp.ne.s32.totalorder %s549, %s550
      %p564 = scmp.eq.s32.totalorder %s34, 3
      %p565 = por %p563, %p564
      %p567 = scmp.ne.s32.totalorder %s550, %s566
      %p568 = scmp.eq.s32.totalorder %s34, 0
      %p569 = por %p567, %p568
      %p570 = scmp.le.s32.totalorder 1, %s28
      %p571 = scmp.lt.s32.totalorder %s28, 5
      %p572 = pnand %p570, %p571
      %p573 = pneg %p572
      // Predicated region
      $region9: #{roberta_cross_encoder.1} parent=5 // pred_check
        _
      $region10: #{roberta_cross_encoder.1} parent=5 // pred_check_branch
        %575 = sbr.rel (%p572) target = $region12
      $region11: #{roberta_cross_encoder.1} parent=5 // pred_region
        %s576 = ssub.s32 %s28, 1
      $region12: #{roberta_cross_encoder.1} parent=5 // pred_fallthru
        _
      %p577 = scmp.lt.s32.totalorder %s28, 4
      // Predicated region
      $region13: #{roberta_cross_encoder.1} parent=5 // pred_check
        %p578 = pneg %p577
      $region14: #{roberta_cross_encoder.1} parent=5 // pred_check_branch
        %580 = sbr.rel (%p578) target = $region16
      $region15: #{roberta_cross_encoder.1} parent=5 // pred_region
        // Predicated region
        $region17: #{roberta_cross_encoder.1} parent=15 // pred_check
          %p581 = pneg %p60
        $region18: #{roberta_cross_encoder.1} parent=15 // pred_check_branch
          %583 = sbr.rel (%p581) target = $region20
        $region19: #{roberta_cross_encoder.1} parent=15 // pred_region
          %p584 = scmp.lt.s32.totalorder %s35, 1
          %s585 = scalar_select %p584, %s35, 1
          %s586 = smul.addr %s585, 2
          %s587 = smul.addr %s586, 8
          %s588 = scalar_lea.vmem %s0, %s587
        $region20: #{roberta_cross_encoder.1} parent=15 // pred_fallthru
          _
        // Predicated region
        $region21: #{roberta_cross_encoder.1} parent=15 // pred_check
          %p589 = pneg %p86
        $region22: #{roberta_cross_encoder.1} parent=15 // pred_check_branch
          %591 = sbr.rel (%p589) target = $region24
        $region23: #{roberta_cross_encoder.1} parent=15 // pred_region
          %p592 = scmp.lt.s32.totalorder %s35, 1
          %s593 = scalar_select %p592, %s35, 1
          %s594 = smul.addr %s593, 8
          %s595 = scalar_lea.vmem %s1, %s594
        $region24: #{roberta_cross_encoder.1} parent=15 // pred_fallthru
          _
        // Predicated region
        $region25: #{roberta_cross_encoder.1} parent=15 // pred_check
          %p596 = pneg %p112
        $region26: #{roberta_cross_encoder.1} parent=15 // pred_check_branch
          %598 = sbr.rel (%p596) target = $region28
        $region27: #{roberta_cross_encoder.1} parent=15 // pred_region
          %p599 = scmp.lt.s32.totalorder %s35, 1
          %s600 = scalar_select %p599, %s35, 1
          %s601 = scalar_lea.vmem %s2, %s600
        $region28: #{roberta_cross_encoder.1} parent=15 // pred_fallthru
          _
        // Predicated region
        $region29: #{roberta_cross_encoder.1} parent=15 // pred_check
          %p602 = pneg %p138
        $region30: #{roberta_cross_encoder.1} parent=15 // pred_check_branch
          %604 = sbr.rel (%p602) target = $region32
        $region31: #{roberta_cross_encoder.1} parent=15 // pred_region
          %p605 = scmp.lt.s32.totalorder %s36, 1
          %s606 = scalar_select %p605, %s36, 1
          %s607 = smul.addr %s606, 8
          %s608 = smul.addr %s607, 4
          %s609 = scalar_lea.vmem %s3, %s608
        $region32: #{roberta_cross_encoder.1} parent=15 // pred_fallthru
          _
        // Predicated region
        $region33: #{roberta_cross_encoder.1} parent=15 // pred_check
          %p610 = pneg %p164
        $region34: #{roberta_cross_encoder.1} parent=15 // pred_check_branch
          %612 = sbr.rel (%p610) target = $region36
        $region35: #{roberta_cross_encoder.1} parent=15 // pred_region
          %p613 = scmp.lt.s32.totalorder %s36, 1
          %s614 = scalar_select %p613, %s36, 1
          %s615 = scalar_lea.vmem %s4, %s614
        $region36: #{roberta_cross_encoder.1} parent=15 // pred_fallthru
          _
        // Predicated region
        $region37: #{roberta_cross_encoder.1} parent=15 // pred_check
          %p616 = pneg %p190
        $region38: #{roberta_cross_encoder.1} parent=15 // pred_check_branch
          %618 = sbr.rel (%p616) target = $region40
        $region39: #{roberta_cross_encoder.1} parent=15 // pred_region
          %p619 = scmp.lt.s32.totalorder %s36, 1
          %s620 = scalar_select %p619, %s36, 1
          %s621 = smul.addr %s620, 8
          %s622 = smul.addr %s621, 4
          %s623 = scalar_lea.vmem %s5, %s622
        $region40: #{roberta_cross_encoder.1} parent=15 // pred_fallthru
          _
        // Predicated region
        $region41: #{roberta_cross_encoder.1} parent=15 // pred_check
          %p624 = pneg %p216
        $region42: #{roberta_cross_encoder.1} parent=15 // pred_check_branch
          %626 = sbr.rel (%p624) target = $region44
        $region43: #{roberta_cross_encoder.1} parent=15 // pred_region
          %p627 = scmp.lt.s32.totalorder %s36, 1
          %s628 = scalar_select %p627, %s36, 1
          %s629 = scalar_lea.vmem %s6, %s628
        $region44: #{roberta_cross_encoder.1} parent=15 // pred_fallthru
          _
        // Predicated region
        $region45: #{roberta_cross_encoder.1} parent=15 // pred_check
          %p630 = pneg %p242
        $region46: #{roberta_cross_encoder.1} parent=15 // pred_check_branch
          %632 = sbr.rel (%p630) target = $region48
        $region47: #{roberta_cross_encoder.1} parent=15 // pred_region
          %p633 = scmp.lt.s32.totalorder %s36, 1
          %s634 = scalar_select %p633, %s36, 1
          %s635 = smul.addr %s634, 8
          %s636 = smul.addr %s635, 4
          %s637 = scalar_lea.vmem %s7, %s636
        $region48: #{roberta_cross_encoder.1} parent=15 // pred_fallthru
          _
        // Predicated region
        $region49: #{roberta_cross_encoder.1} parent=15 // pred_check
          %p638 = pneg %p268
        $region50: #{roberta_cross_encoder.1} parent=15 // pred_check_branch
          %640 = sbr.rel (%p638) target = $region52
        $region51: #{roberta_cross_encoder.1} parent=15 // pred_region
          %p641 = scmp.lt.s32.totalorder %s36, 1
          %s642 = scalar_select %p641, %s36, 1
          %s643 = scalar_lea.vmem %s8, %s642
        $region52: #{roberta_cross_encoder.1} parent=15 // pred_fallthru
          _
        // Predicated region
        $region53: #{roberta_cross_encoder.1} parent=15 // pred_check
          %p644 = pneg %p294
        $region54: #{roberta_cross_encoder.1} parent=15 // pred_check_branch
          %646 = sbr.rel (%p644) target = $region56
        $region55: #{roberta_cross_encoder.1} parent=15 // pred_region
          %p647 = scmp.lt.s32.totalorder %s36, 1
          %s648 = scalar_select %p647, %s36, 1
          %s649 = smul.addr %s648, 8
          %s650 = smul.addr %s649, 4
          %s651 = scalar_lea.vmem %s9, %s650
        $region56: #{roberta_cross_encoder.1} parent=15 // pred_fallthru
          _
        // Predicated region
        $region57: #{roberta_cross_encoder.1} parent=15 // pred_check
          %p652 = pneg %p320
        $region58: #{roberta_cross_encoder.1} parent=15 // pred_check_branch
          %654 = sbr.rel (%p652) target = $region60
        $region59: #{roberta_cross_encoder.1} parent=15 // pred_region
          %p655 = scmp.lt.s32.totalorder %s36, 1
          %s656 = scalar_select %p655, %s36, 1
          %s657 = scalar_lea.vmem %s10, %s656
        $region60: #{roberta_cross_encoder.1} parent=15 // pred_fallthru
          _
        // Predicated region
        $region61: #{roberta_cross_encoder.1} parent=15 // pred_check
          %p658 = pneg %p346
        $region62: #{roberta_cross_encoder.1} parent=15 // pred_check_branch
          %660 = sbr.rel (%p658) target = $region64
        $region63: #{roberta_cross_encoder.1} parent=15 // pred_region
          %p661 = scmp.lt.s32.totalorder %s36, 1
          %s662 = scalar_select %p661, %s36, 1
          %s663 = scalar_lea.vmem %s11, %s662
        $region64: #{roberta_cross_encoder.1} parent=15 // pred_fallthru
          _
        // Predicated region
        $region65: #{roberta_cross_encoder.1} parent=15 // pred_check
          %p664 = pneg %p372
        $region66: #{roberta_cross_encoder.1} parent=15 // pred_check_branch
          %666 = sbr.rel (%p664) target = $region68
        $region67: #{roberta_cross_encoder.1} parent=15 // pred_region
          %p667 = scmp.lt.s32.totalorder %s36, 1
          %s668 = scalar_select %p667, %s36, 1
          %s669 = scalar_lea.vmem %s12, %s668
        $region68: #{roberta_cross_encoder.1} parent=15 // pred_fallthru
          _
        // Predicated region
        $region69: #{roberta_cross_encoder.1} parent=15 // pred_check
          %p670 = pneg %p398
        $region70: #{roberta_cross_encoder.1} parent=15 // pred_check_branch
          %672 = sbr.rel (%p670) target = $region72
        $region71: #{roberta_cross_encoder.1} parent=15 // pred_region
          %p673 = scmp.lt.s32.totalorder %s36, 1
          %s674 = scalar_select %p673, %s36, 1
          %s675 = smul.addr %s674, 16
          %s676 = smul.addr %s675, 4
          %s677 = scalar_lea.vmem %s13, %s676
        $region72: #{roberta_cross_encoder.1} parent=15 // pred_fallthru
          _
        // Predicated region
        $region73: #{roberta_cross_encoder.1} parent=15 // pred_check
          %p678 = pneg %p424
        $region74: #{roberta_cross_encoder.1} parent=15 // pred_check_branch
          %680 = sbr.rel (%p678) target = $region76
        $region75: #{roberta_cross_encoder.1} parent=15 // pred_region
          %p681 = scmp.lt.s32.totalorder %s36, 1
          %s682 = scalar_select %p681, %s36, 1
          %s683 = smul.addr %s682, 2
          %s684 = scalar_lea.vmem %s14, %s683
        $region76: #{roberta_cross_encoder.1} parent=15 // pred_fallthru
          _
        // Predicated region
        $region77: #{roberta_cross_encoder.1} parent=15 // pred_check
          %p685 = pneg %p450
        $region78: #{roberta_cross_encoder.1} parent=15 // pred_check_branch
          %687 = sbr.rel (%p685) target = $region80
        $region79: #{roberta_cross_encoder.1} parent=15 // pred_region
          %p688 = scmp.lt.s32.totalorder %s36, 1
          %s689 = scalar_select %p688, %s36, 1
          %s690 = smul.addr %s689, 32
          %s691 = smul.addr %s690, 4
          %s692 = scalar_lea.vmem %s15, %s691
        $region80: #{roberta_cross_encoder.1} parent=15 // pred_fallthru
          _
        // Predicated region
        $region81: #{roberta_cross_encoder.1} parent=15 // pred_check
          %p693 = pneg %p476
        $region82: #{roberta_cross_encoder.1} parent=15 // pred_check_branch
          %695 = sbr.rel (%p693) target = $region84
        $region83: #{roberta_cross_encoder.1} parent=15 // pred_region
          %p696 = scmp.lt.s32.totalorder %s36, 1
          %s697 = scalar_select %p696, %s36, 1
          %s698 = scalar_lea.vmem %s16, %s697
        $region84: #{roberta_cross_encoder.1} parent=15 // pred_fallthru
          _
        // Predicated region
        $region85: #{roberta_cross_encoder.1} parent=15 // pred_check
          %p699 = pneg %p502
        $region86: #{roberta_cross_encoder.1} parent=15 // pred_check_branch
          %701 = sbr.rel (%p699) target = $region88
        $region87: #{roberta_cross_encoder.1} parent=15 // pred_region
          %p702 = scmp.lt.s32.totalorder %s36, 1
          %s703 = scalar_select %p702, %s36, 1
          %s704 = scalar_lea.vmem %s17, %s703
        $region88: #{roberta_cross_encoder.1} parent=15 // pred_fallthru
          _
        // Predicated region
        $region89: #{roberta_cross_encoder.1} parent=15 // pred_check
          %p705 = pneg %p528
        $region90: #{roberta_cross_encoder.1} parent=15 // pred_check_branch
          %707 = sbr.rel (%p705) target = $region92
        $region91: #{roberta_cross_encoder.1} parent=15 // pred_region
          %p708 = scmp.lt.s32.totalorder %s36, 1
          %s709 = scalar_select %p708, %s36, 1
          %s710 = scalar_lea.vmem %s18, %s709
        $region92: #{roberta_cross_encoder.1} parent=15 // pred_fallthru
          _
      $region16: #{roberta_cross_encoder.1} parent=5 // pred_fallthru
        _
      %p711 = scmp.le.s32.totalorder 1, %s28
      %p712 = scmp.lt.s32.totalorder %s28, 5
      %p713 = pnand %p711, %p712
      %p714 = pneg %p713
      // Predicated region
      $region93: #{roberta_cross_encoder.1} parent=5 // pred_check
        _
      $region94: #{roberta_cross_encoder.1} parent=5 // pred_check_branch
        %716 = sbr.rel (%p713) target = $region96
      $region95: #{roberta_cross_encoder.1} parent=5 // pred_region
        %s717 = ssub.s32 %s28, 1
        %p718 = scmp.lt.s32.totalorder %s37, 1
        %s719 = scalar_select %p718, %s37, 1
        %s720 = smul.addr %s719, 2
        %s721 = smul.addr %s720, 8
        %s722 = scalar_lea.vmem %s0, %s721
        %p723 = pneg %p66
        %p724 = pneg %p63
        %p725 = scmp.lt.s32.totalorder %s37, 1
        %s726 = scalar_select %p725, %s37, 1
        %s727 = smul.addr %s726, 8
        %s728 = scalar_lea.vmem %s1, %s727
        %p729 = pneg %p92
        %p730 = pneg %p89
        %p731 = scmp.lt.s32.totalorder %s37, 1
        %s732 = scalar_select %p731, %s37, 1
        %s733 = scalar_lea.vmem %s2, %s732
        %p734 = pneg %p118
        %p735 = pneg %p115
        %p736 = scmp.lt.s32.totalorder %s38, 1
        %s737 = scalar_select %p736, %s38, 1
        %s738 = smul.addr %s737, 8
        %s739 = smul.addr %s738, 4
        %s740 = scalar_lea.vmem %s3, %s739
        %p741 = pneg %p144
        %p742 = pneg %p141
        %p743 = scmp.lt.s32.totalorder %s38, 1
        %s744 = scalar_select %p743, %s38, 1
        %s745 = scalar_lea.vmem %s4, %s744
        %p746 = pneg %p170
        %p747 = pneg %p167
        %p748 = scmp.lt.s32.totalorder %s38, 1
        %s749 = scalar_select %p748, %s38, 1
        %s750 = smul.addr %s749, 8
        %s751 = smul.addr %s750, 4
        %s752 = scalar_lea.vmem %s5, %s751
        %p753 = pneg %p196
        %p754 = pneg %p193
        %p755 = scmp.lt.s32.totalorder %s38, 1
        %s756 = scalar_select %p755, %s38, 1
        %s757 = scalar_lea.vmem %s6, %s756
        %p758 = pneg %p222
        %p759 = pneg %p219
        %p760 = scmp.lt.s32.totalorder %s38, 1
        %s761 = scalar_select %p760, %s38, 1
        %s762 = smul.addr %s761, 8
        %s763 = smul.addr %s762, 4
        %s764 = scalar_lea.vmem %s7, %s763
        %p765 = pneg %p248
        %p766 = pneg %p245
        %p767 = scmp.lt.s32.totalorder %s38, 1
        %s768 = scalar_select %p767, %s38, 1
        %s769 = scalar_lea.vmem %s8, %s768
        %p770 = pneg %p274
        %p771 = pneg %p271
        %p772 = scmp.lt.s32.totalorder %s38, 1
        %s773 = scalar_select %p772, %s38, 1
        %s774 = smul.addr %s773, 8
        %s775 = smul.addr %s774, 4
        %s776 = scalar_lea.vmem %s9, %s775
        %p777 = pneg %p300
        %p778 = pneg %p297
        %p779 = scmp.lt.s32.totalorder %s38, 1
        %s780 = scalar_select %p779, %s38, 1
        %s781 = scalar_lea.vmem %s10, %s780
        %p782 = pneg %p326
        %p783 = pneg %p323
        %p784 = scmp.lt.s32.totalorder %s38, 1
        %s785 = scalar_select %p784, %s38, 1
        %s786 = scalar_lea.vmem %s11, %s785
        %p787 = pneg %p352
        %p788 = pneg %p349
        %p789 = scmp.lt.s32.totalorder %s38, 1
        %s790 = scalar_select %p789, %s38, 1
        %s791 = scalar_lea.vmem %s12, %s790
        %p792 = pneg %p378
        %p793 = pneg %p375
        %p794 = scmp.lt.s32.totalorder %s38, 1
        %s795 = scalar_select %p794, %s38, 1
        %s796 = smul.addr %s795, 16
        %s797 = smul.addr %s796, 4
        %s798 = scalar_lea.vmem %s13, %s797
        %p799 = pneg %p404
        %p800 = pneg %p401
        %p801 = scmp.lt.s32.totalorder %s38, 1
        %s802 = scalar_select %p801, %s38, 1
        %s803 = smul.addr %s802, 2
        %s804 = scalar_lea.vmem %s14, %s803
        %p805 = pneg %p430
        %p806 = pneg %p427
        %p807 = scmp.lt.s32.totalorder %s38, 1
        %s808 = scalar_select %p807, %s38, 1
        %s809 = smul.addr %s808, 32
        %s810 = smul.addr %s809, 4
        %s811 = scalar_lea.vmem %s15, %s810
        %p812 = pneg %p456
        %p813 = pneg %p453
        %p814 = scmp.lt.s32.totalorder %s38, 1
        %s815 = scalar_select %p814, %s38, 1
        %s816 = scalar_lea.vmem %s16, %s815
        %p817 = pneg %p482
        %p818 = pneg %p479
        %p819 = scmp.lt.s32.totalorder %s38, 1
        %s820 = scalar_select %p819, %s38, 1
        %s821 = scalar_lea.vmem %s17, %s820
        %p822 = pneg %p508
        %p823 = pneg %p505
        %p824 = scmp.lt.s32.totalorder %s38, 1
        %s825 = scalar_select %p824, %s38, 1
        %s826 = scalar_lea.vmem %s18, %s825
        %p827 = pneg %p534
        %p828 = pneg %p531
        %p829 = pneg %p562
        %p830 = pneg %p559
        %s831 = sand.u32 %s549, 1
        %s832 = scalar_lea.sflag [#allocation4], %s831
        %s833 = sand.u32 %s549, 1
        %s834 = smul.addr %s833, 16
        %s835 = scalar_lea.vmem [#allocation3], %s834
        %p836 = scmp.lt.s32.totalorder %s37, 1
        %s837 = scalar_select %p836, %s37, 1
        %s838 = smul.addr %s837, 2
        %s839 = smul.addr %s838, 8
        %s840 = scalar_lea.vmem %s0, %s839
        %p841 = scmp.lt.s32.totalorder %s37, 1
        %s842 = scalar_select %p841, %s37, 1
        %s843 = smul.addr %s842, 8
        %s844 = scalar_lea.vmem %s1, %s843
        %p845 = scmp.lt.s32.totalorder %s37, 1
        %s846 = scalar_select %p845, %s37, 1
        %s847 = scalar_lea.vmem %s2, %s846
        %p848 = scmp.lt.s32.totalorder %s38, 1
        %s849 = scalar_select %p848, %s38, 1
        %s850 = smul.addr %s849, 8
        %s851 = smul.addr %s850, 4
        %s852 = scalar_lea.vmem %s3, %s851
        %p853 = scmp.lt.s32.totalorder %s38, 1
        %s854 = scalar_select %p853, %s38, 1
        %s855 = scalar_lea.vmem %s4, %s854
        %p856 = scmp.lt.s32.totalorder %s38, 1
        %s857 = scalar_select %p856, %s38, 1
        %s858 = smul.addr %s857, 8
        %s859 = smul.addr %s858, 4
        %s860 = scalar_lea.vmem %s5, %s859
        %p861 = scmp.lt.s32.totalorder %s38, 1
        %s862 = scalar_select %p861, %s38, 1
        %s863 = scalar_lea.vmem %s6, %s862
        %p864 = scmp.lt.s32.totalorder %s38, 1
        %s865 = scalar_select %p864, %s38, 1
        %s866 = smul.addr %s865, 8
        %s867 = smul.addr %s866, 4
        %s868 = scalar_lea.vmem %s7, %s867
        %p869 = scmp.lt.s32.totalorder %s38, 1
        %s870 = scalar_select %p869, %s38, 1
        %s871 = scalar_lea.vmem %s8, %s870
        %p872 = scmp.lt.s32.totalorder %s38, 1
        %s873 = scalar_select %p872, %s38, 1
        %s874 = smul.addr %s873, 8
        %s875 = smul.addr %s874, 4
        %s876 = scalar_lea.vmem %s9, %s875
        %p877 = scmp.lt.s32.totalorder %s38, 1
        %s878 = scalar_select %p877, %s38, 1
        %s879 = scalar_lea.vmem %s10, %s878
        %p880 = scmp.lt.s32.totalorder %s38, 1
        %s881 = scalar_select %p880, %s38, 1
        %s882 = scalar_lea.vmem %s11, %s881
        %p883 = scmp.lt.s32.totalorder %s38, 1
        %s884 = scalar_select %p883, %s38, 1
        %s885 = scalar_lea.vmem %s12, %s884
        %p886 = scmp.lt.s32.totalorder %s38, 1
        %s887 = scalar_select %p886, %s38, 1
        %s888 = smul.addr %s887, 16
        %s889 = smul.addr %s888, 4
        %s890 = scalar_lea.vmem %s13, %s889
        %p891 = scmp.lt.s32.totalorder %s38, 1
        %s892 = scalar_select %p891, %s38, 1
        %s893 = smul.addr %s892, 2
        %s894 = scalar_lea.vmem %s14, %s893
        %p895 = scmp.lt.s32.totalorder %s38, 1
        %s896 = scalar_select %p895, %s38, 1
        %s897 = smul.addr %s896, 32
        %s898 = smul.addr %s897, 4
        %s899 = scalar_lea.vmem %s15, %s898
        %p900 = scmp.lt.s32.totalorder %s38, 1
        %s901 = scalar_select %p900, %s38, 1
        %s902 = scalar_lea.vmem %s16, %s901
        %p903 = scmp.lt.s32.totalorder %s38, 1
        %s904 = scalar_select %p903, %s38, 1
        %s905 = scalar_lea.vmem %s17, %s904
        %p906 = scmp.lt.s32.totalorder %s38, 1
        %s907 = scalar_select %p906, %s38, 1
        %s908 = scalar_lea.vmem %s18, %s907
        %p910 = scmp.eq.s32.totalorder %s38, 0
        // Predicated region
        $region97: #{roberta_cross_encoder.1} parent=95 // pred_check
          %p911 = pneg %p910
        $region98: #{roberta_cross_encoder.1} parent=95 // pred_check_branch
          %913 = sbr.rel (%p911) target = $region100
        $region99: #{roberta_cross_encoder.1} parent=95 // pred_region
          %v914 = vld [vmem:[%s840] sm:$0xff]
          %v915 = vld [vmem:[%s840 + $0x8] sm:$0xff]
          %vm916 = vcmask 523264
          %917 = vst.msk [vmem:[#allocation2] sm:$0xff] %vm916, %v914
          %918 = vst.msk [vmem:[#allocation2 + $0x8] sm:$0xff] %vm916, %v915
        $region100: #{roberta_cross_encoder.1} parent=95 // pred_fallthru
          _
        %v919 = vld [vmem:[#allocation2] sm:$0xff]
        %v920 = vld [vmem:[#allocation2 + $0x8] sm:$0xff]
        %v921 = vpack.c.bf16 %v920, %v919
        %v922 = vld [vmem:[%s844] sm:$0xff]
        %v923 = vpack.c.bf16 %v922, %v922
        %v924 = vld [vmem:[%s852] sm:$0xf]
        %v925 = vld [vmem:[%s852 + $0x4] sm:$0xf]
        %v926 = vld [vmem:[%s852 + $0x8] sm:$0xf]
        %v927 = vld [vmem:[%s852 + $0xc] sm:$0xf]
        %v928 = vld [vmem:[%s852 + $0x10] sm:$0xf]
        %v929 = vld [vmem:[%s852 + $0x14] sm:$0xf]
        %v930 = vld [vmem:[%s852 + $0x18] sm:$0xf]
        %v931 = vld [vmem:[%s852 + $0x1c] sm:$0xf]
        %v932 = vld [vmem:[%s855] sm:$0x1]
        %v934 = vlaneseq
        %v935 = vshrl.u32 %v934, 7
        %v936 = vsub.s32 0, %v935
        %v937 = vrot.slane %v932, %v936
        %v947 = vunpack.c.l.b16 %v924
        %v948 = vunpack.c.l.b16 %v925
        %v949 = vunpack.c.l.b16 %v926
        %v950 = vunpack.c.l.b16 %v927
        %v951 = vunpack.c.l.b16 %v928
        %v952 = vunpack.c.l.b16 %v929
        %v953 = vunpack.c.l.b16 %v930
        %v954 = vunpack.c.l.b16 %v931
        %v955 = vpack.c.b16 %v948, %v947
        %v956 = vpack.c.b16 %v950, %v949
        %v957 = vpack.c.b16 %v952, %v951
        %v958 = vpack.c.b16 %v954, %v953
        %vm963 = vcmask 523264
        %v965 = vsel %vm963, %v921, 0
        %967 = vmatprep.subr.bf16.mxu0 0
        %968 = vmatpush1.bf16.msra.mxu0 %v955
        %969 = vmatprep.subr.bf16.mxu0 0
        %970 = vmatpush1.bf16.msra.mxu0 %v956
        %971 = vmatprep.subr.bf16.mxu0 0
        %972 = vmatpush1.bf16.msra.mxu0 %v957
        %973 = vmatprep.subr.bf16.mxu0 0
        %974 = vmatpush1.bf16.msra.mxu0 %v958
        %975 = vmatprep.subr.bf16.mxu0 0
        %976 = vmatpush1.bf16.msra.mxu0 0
        %977 = vmatprep.subr.bf16.mxu0 0
        %978 = vmatpush1.bf16.msra.mxu0 0
        %979 = vmatprep.subr.bf16.mxu0 0
        %980 = vmatpush1.bf16.msra.mxu0 0
        %981 = vmatprep.subr.bf16.mxu0 0
        %982 = vmatpush1.bf16.msra.mxu0 0
        %983 = vmatprep.subr.bf16.mxu0 0
        %984 = vmatpush1.bf16.msra.mxu0 0
        %985 = vmatprep.subr.bf16.mxu0 0
        %986 = vmatpush1.bf16.msra.mxu0 0
        %987 = vmatprep.subr.bf16.mxu0 0
        %988 = vmatpush1.bf16.msra.mxu0 0
        %989 = vmatprep.subr.bf16.mxu0 0
        %990 = vmatpush1.bf16.msra.mxu0 0
        %991 = vmatprep.subr.bf16.mxu0 0
        %992 = vmatpush1.bf16.msra.mxu0 0
        %993 = vmatprep.subr.bf16.mxu0 0
        %994 = vmatpush1.bf16.msra.mxu0 0
        %995 = vmatprep.subr.bf16.mxu0 0
        %996 = vmatpush1.bf16.msra.mxu0 0
        %997 = vmatprep.subr.bf16.mxu0 0
        %998 = vmatpush1.bf16.msra.mxu0 0
        %999 = vmatprep.mubr.bf16.mxu0 0
        %1000 = vmatmul.mubr.bf16.gmra.mrb[0].mxu0 %v965
        %v1001 = vpop.f32.mrb[0].mxu0
        %v1002 = vadd.f32 %v937, %v1001
        %v1003 = vpop.f32.mrb[0].mxu0
        %v1004 = vpop.f32.mrb[0].mxu0
        %v1005 = vadd.f32 %v937, %v1004
        %v1006 = vpop.f32.mrb[0].mxu0
        %1007 = vdwg.mxu0
        %v1008 = vld [vmem:[%s860] sm:$0xf]
        %v1009 = vld [vmem:[%s860 + $0x4] sm:$0xf]
        %v1010 = vld [vmem:[%s860 + $0x8] sm:$0xf]
        %v1011 = vld [vmem:[%s860 + $0xc] sm:$0xf]
        %v1012 = vld [vmem:[%s860 + $0x10] sm:$0xf]
        %v1013 = vld [vmem:[%s860 + $0x14] sm:$0xf]
        %v1014 = vld [vmem:[%s860 + $0x18] sm:$0xf]
        %v1015 = vld [vmem:[%s860 + $0x1c] sm:$0xf]
        %v1016 = vld [vmem:[%s863] sm:$0x1]
        %v1018 = vlaneseq
        %v1019 = vshrl.u32 %v1018, 7
        %v1020 = vsub.s32 0, %v1019
        %v1021 = vrot.slane %v1016, %v1020
        %v1031 = vunpack.c.l.b16 %v1008
        %v1032 = vunpack.c.l.b16 %v1009
        %v1033 = vunpack.c.l.b16 %v1010
        %v1034 = vunpack.c.l.b16 %v1011
        %v1035 = vunpack.c.l.b16 %v1012
        %v1036 = vunpack.c.l.b16 %v1013
        %v1037 = vunpack.c.l.b16 %v1014
        %v1038 = vunpack.c.l.b16 %v1015
        %v1039 = vpack.c.b16 %v1032, %v1031
        %v1040 = vpack.c.b16 %v1034, %v1033
        %v1041 = vpack.c.b16 %v1036, %v1035
        %v1042 = vpack.c.b16 %v1038, %v1037
        %v1048 = vsel %vm963, %v923, 0
        %1050 = vmatprep.subr.bf16.mxu0 0
        %1051 = vmatpush1.bf16.msra.mxu0 %v1039
        %1052 = vmatprep.subr.bf16.mxu0 0
        %1053 = vmatpush1.bf16.msra.mxu0 %v1040
        %1054 = vmatprep.subr.bf16.mxu0 0
        %1055 = vmatpush1.bf16.msra.mxu0 %v1041
        %1056 = vmatprep.subr.bf16.mxu0 0
        %1057 = vmatpush1.bf16.msra.mxu0 %v1042
        %1058 = vmatprep.subr.bf16.mxu0 0
        %1059 = vmatpush1.bf16.msra.mxu0 0
        %1060 = vmatprep.subr.bf16.mxu0 0
        %1061 = vmatpush1.bf16.msra.mxu0 0
        %1062 = vmatprep.subr.bf16.mxu0 0
        %1063 = vmatpush1.bf16.msra.mxu0 0
        %1064 = vmatprep.subr.bf16.mxu0 0
        %1065 = vmatpush1.bf16.msra.mxu0 0
        %1066 = vmatprep.subr.bf16.mxu0 0
        %1067 = vmatpush1.bf16.msra.mxu0 0
        %1068 = vmatprep.subr.bf16.mxu0 0
        %1069 = vmatpush1.bf16.msra.mxu0 0
        %1070 = vmatprep.subr.bf16.mxu0 0
        %1071 = vmatpush1.bf16.msra.mxu0 0
        %1072 = vmatprep.subr.bf16.mxu0 0
        %1073 = vmatpush1.bf16.msra.mxu0 0
        %1074 = vmatprep.subr.bf16.mxu0 0
        %1075 = vmatpush1.bf16.msra.mxu0 0
        %1076 = vmatprep.subr.bf16.mxu0 0
        %1077 = vmatpush1.bf16.msra.mxu0 0
        %1078 = vmatprep.subr.bf16.mxu0 0
        %1079 = vmatpush1.bf16.msra.mxu0 0
        %1080 = vmatprep.subr.bf16.mxu0 0
        %1081 = vmatpush1.bf16.msra.mxu0 0
        %1082 = vmatprep.mubr.bf16.mxu0 0
        %1083 = vmatmul.mubr.bf16.gmra.mrb[0].mxu0 %v1048
        %v1084 = vpop.f32.mrb[0].mxu0
        %v1085 = vadd.f32 %v1021, %v1084
        %v1086 = vpop.f32.mrb[0].mxu0
        %v1087 = vpop.f32.mrb[0].mxu0
        %v1088 = vpop.f32.mrb[0].mxu0
        %1089 = vdwg.mxu0
        %v1090 = vld [vmem:[%s868] sm:$0xf]
        %v1091 = vld [vmem:[%s868 + $0x4] sm:$0xf]
        %v1092 = vld [vmem:[%s868 + $0x8] sm:$0xf]
        %v1093 = vld [vmem:[%s868 + $0xc] sm:$0xf]
        %v1094 = vld [vmem:[%s868 + $0x10] sm:$0xf]
        %v1095 = vld [vmem:[%s868 + $0x14] sm:$0xf]
        %v1096 = vld [vmem:[%s868 + $0x18] sm:$0xf]
        %v1097 = vld [vmem:[%s868 + $0x1c] sm:$0xf]
        %v1098 = vld [vmem:[%s871] sm:$0x1]
        %v1100 = vlaneseq
        %v1101 = vshrl.u32 %v1100, 7
        %v1102 = vsub.s32 0, %v1101
        %v1103 = vrot.slane %v1098, %v1102
        %v1113 = vunpack.c.l.b16 %v1090
        %v1114 = vunpack.c.l.b16 %v1091
        %v1115 = vunpack.c.l.b16 %v1092
        %v1116 = vunpack.c.l.b16 %v1093
        %v1117 = vunpack.c.l.b16 %v1094
        %v1118 = vunpack.c.l.b16 %v1095
        %v1119 = vunpack.c.l.b16 %v1096
        %v1120 = vunpack.c.l.b16 %v1097
        %v1121 = vpack.c.b16 %v1114, %v1113
        %v1122 = vpack.c.b16 %v1116, %v1115
        %v1123 = vpack.c.b16 %v1118, %v1117
        %v1124 = vpack.c.b16 %v1120, %v1119
        %1129 = vmatprep.subr.bf16.mxu0 0
        %1130 = vmatpush1.bf16.msra.mxu0 %v1121
        %1131 = vmatprep.subr.bf16.mxu0 0
        %1132 = vmatpush1.bf16.msra.mxu0 %v1122
        %1133 = vmatprep.subr.bf16.mxu0 0
        %1134 = vmatpush1.bf16.msra.mxu0 %v1123
        %1135 = vmatprep.subr.bf16.mxu0 0
        %1136 = vmatpush1.bf16.msra.mxu0 %v1124
        %1137 = vmatprep.subr.bf16.mxu0 0
        %1138 = vmatpush1.bf16.msra.mxu0 0
        %1139 = vmatprep.subr.bf16.mxu0 0
        %1140 = vmatpush1.bf16.msra.mxu0 0
        %1141 = vmatprep.subr.bf16.mxu0 0
        %1142 = vmatpush1.bf16.msra.mxu0 0
        %1143 = vmatprep.subr.bf16.mxu0 0
        %1144 = vmatpush1.bf16.msra.mxu0 0
        %1145 = vmatprep.subr.bf16.mxu0 0
        %1146 = vmatpush1.bf16.msra.mxu0 0
        %1147 = vmatprep.subr.bf16.mxu0 0
        %1148 = vmatpush1.bf16.msra.mxu0 0
        %1149 = vmatprep.subr.bf16.mxu0 0
        %1150 = vmatpush1.bf16.msra.mxu0 0
        %1151 = vmatprep.subr.bf16.mxu0 0
        %1152 = vmatpush1.bf16.msra.mxu0 0
        %1153 = vmatprep.subr.bf16.mxu0 0
        %1154 = vmatpush1.bf16.msra.mxu0 0
        %1155 = vmatprep.subr.bf16.mxu0 0
        %1156 = vmatpush1.bf16.msra.mxu0 0
        %1157 = vmatprep.subr.bf16.mxu0 0
        %1158 = vmatpush1.bf16.msra.mxu0 0
        %1159 = vmatprep.subr.bf16.mxu0 0
        %1160 = vmatpush1.bf16.msra.mxu0 0
        %1161 = vmatprep.mubr.bf16.mxu0 0
        %1162 = vmatmul.mubr.bf16.gmra.mrb[0].mxu0 %v1048
        %v1163 = vpop.f32.mrb[0].mxu0
        %v1164 = vadd.f32 %v1103, %v1163
        %v1165 = vpop.f32.mrb[0].mxu0
        %v1166 = vpop.f32.mrb[0].mxu0
        %v1167 = vpop.f32.mrb[0].mxu0
        %1168 = vdwg.mxu0
        %v1169 = vpack.c.bf16 %v1005, %v1002
        %v1170 = vpack.c.bf16 %v1085, %v1085
        %v1171 = vpack.c.bf16 %v1164, %v1164
        %v1172 = vld [vmem:[%s847] sm:$0x1]
        %v1174 = vlaneseq
        %v1175 = vshrl.u32 %v1174, 7
        %v1176 = vsub.s32 0, %v1175
        %v1177 = vrot.slane %v1172, %v1176
        %vm1179 = vcmask 130048
        %v1181 = vsel %vm1179, %v1169, 0
        %v1184 = vsel %vm1179, %v1170, 0
        %1186 = vmatprep.subr.bf16.mxu0 0
        %1187 = vmatpush1.bf16.xpose.msra.mxu0 %v1184
        %1188 = vmatprep.subr.bf16.mxu0 0
        %1189 = vmatpush1.bf16.xpose.msra.mxu0 0
        %1190 = vmatprep.subr.bf16.mxu0 0
        %1191 = vmatpush1.bf16.xpose.msra.mxu0 0
        %1192 = vmatprep.subr.bf16.mxu0 0
        %1193 = vmatpush1.bf16.xpose.msra.mxu0 0
        %1194 = vmatprep.subr.bf16.mxu0 0
        %1195 = vmatpush1.bf16.xpose.msra.mxu0 0
        %1196 = vmatprep.subr.bf16.mxu0 0
        %1197 = vmatpush1.bf16.xpose.msra.mxu0 0
        %1198 = vmatprep.subr.bf16.mxu0 0
        %1199 = vmatpush1.bf16.xpose.msra.mxu0 0
        %1200 = vmatprep.subr.bf16.mxu0 0
        %1201 = vmatpush1.bf16.xpose.msra.mxu0 0
        %1202 = vmatprep.subr.bf16.mxu0 0
        %1203 = vmatpush1.bf16.xpose.msra.mxu0 0
        %1204 = vmatprep.subr.bf16.mxu0 0
        %1205 = vmatpush1.bf16.xpose.msra.mxu0 0
        %1206 = vmatprep.subr.bf16.mxu0 0
        %1207 = vmatpush1.bf16.xpose.msra.mxu0 0
        %1208 = vmatprep.subr.bf16.mxu0 0
        %1209 = vmatpush1.bf16.xpose.msra.mxu0 0
        %1210 = vmatprep.subr.bf16.mxu0 0
        %1211 = vmatpush1.bf16.xpose.msra.mxu0 0
        %1212 = vmatprep.subr.bf16.mxu0 0
        %1213 = vmatpush1.bf16.xpose.msra.mxu0 0
        %1214 = vmatprep.subr.bf16.mxu0 0
        %1215 = vmatpush1.bf16.xpose.msra.mxu0 0
        %1216 = vmatprep.subr.bf16.mxu0 0
        %1217 = vmatpush1.bf16.xpose.msra.mxu0 0
        %1218 = vmatprep.mubr.bf16.mxu0 0
        %1219 = vmatmul.mubr.bf16.gmra.mrb[0].mxu0 %v1181
        %v1220 = vpop.f32.mrb[0].mxu0
        %v1221 = vadd.f32 %v1177, %v1220
        %v1222 = vpop.f32.mrb[0].mxu0
        %v1223 = vpop.f32.mrb[0].mxu0
        %v1224 = vadd.f32 %v1177, %v1223
        %v1225 = vpop.f32.mrb[0].mxu0
        %1226 = vdwg.mxu0
        %vm1227 = vcmask 64512
        %v1228 = vsel %vm1227, %v1221, -inf
        %1229 = vmax.xlane.f32.xlu0 %v1228
        %v1230 = vpop.xlane.xlu0 %1229
        %v1231 = vsel %vm1227, %v1224, -inf
        %1232 = vmax.xlane.f32.xlu0 %v1231
        %v1233 = vpop.xlane.xlu0 %1232
        %v1234 = vsub.f32 %v1221, %v1230
        %v1235 = vsub.f32 %v1224, %v1233
        %v1236 = vmul.f32 %v1234, 1.442695
        %v1237 = vpow.pop %v1236
        %v1238 = vmul.f32 %v1235, 1.442695
        %v1239 = vpow.pop %v1238
        %v1240 = vsel %vm1227, %v1237, 0.0
        %1241 = vadd.xlane.f32.xlu0 %v1240
        %v1242 = vpop.xlane.xlu0 %1241
        %v1243 = vsel %vm1227, %v1239, 0.0
        %1244 = vadd.xlane.f32.xlu0 %v1243
        %v1245 = vpop.xlane.xlu0 %1244
        %v1246 = vrcp.pop %v1242
        %v1247 = vrcp.pop %v1245
        %v1248 = vmul.f32 %v1237, %v1246
        %v1249 = vmul.f32 %v1239, %v1247
        %v1250 = vpack.c.bf16 %v1249, %v1248
        %v1252 = vsel %vm1227, %v1250, 0
        %vm1254 = vcmask 1043456
        %v1256 = vsel %vm1254, %v1171, 0
        %1258 = vmatprep.subr.bf16.mxu0 0
        %1259 = vmatpush1.bf16.msra.mxu0 %v1256
        %1260 = vmatprep.subr.bf16.mxu0 0
        %1261 = vmatpush1.bf16.msra.mxu0 0
        %1262 = vmatprep.subr.bf16.mxu0 0
        %1263 = vmatpush1.bf16.msra.mxu0 0
        %1264 = vmatprep.subr.bf16.mxu0 0
        %1265 = vmatpush1.bf16.msra.mxu0 0
        %1266 = vmatprep.subr.bf16.mxu0 0
        %1267 = vmatpush1.bf16.msra.mxu0 0
        %1268 = vmatprep.subr.bf16.mxu0 0
        %1269 = vmatpush1.bf16.msra.mxu0 0
        %1270 = vmatprep.subr.bf16.mxu0 0
        %1271 = vmatpush1.bf16.msra.mxu0 0
        %1272 = vmatprep.subr.bf16.mxu0 0
        %1273 = vmatpush1.bf16.msra.mxu0 0
        %1274 = vmatprep.subr.bf16.mxu0 0
        %1275 = vmatpush1.bf16.msra.mxu0 0
        %1276 = vmatprep.subr.bf16.mxu0 0
        %1277 = vmatpush1.bf16.msra.mxu0 0
        %1278 = vmatprep.subr.bf16.mxu0 0
        %1279 = vmatpush1.bf16.msra.mxu0 0
        %1280 = vmatprep.subr.bf16.mxu0 0
        %1281 = vmatpush1.bf16.msra.mxu0 0
        %1282 = vmatprep.subr.bf16.mxu0 0
        %1283 = vmatpush1.bf16.msra.mxu0 0
        %1284 = vmatprep.subr.bf16.mxu0 0
        %1285 = vmatpush1.bf16.msra.mxu0 0
        %1286 = vmatprep.subr.bf16.mxu0 0
        %1287 = vmatpush1.bf16.msra.mxu0 0
        %1288 = vmatprep.subr.bf16.mxu0 0
        %1289 = vmatpush1.bf16.msra.mxu0 0
        %1290 = vmatprep.mubr.bf16.mxu0 0
        %1291 = vmatmul.mubr.bf16.gmra.mrb[0].mxu0 %v1252
        %v1292 = vpop.f32.mrb[0].mxu0
        %v1293 = vadd.f32 0.0, %v1292
        %v1294 = vpop.f32.mrb[0].mxu0
        %v1295 = vpop.f32.mrb[0].mxu0
        %v1296 = vadd.f32 0.0, %v1295
        %v1297 = vpop.f32.mrb[0].mxu0
        %1298 = vdwg.mxu0
        %1300 = vrot.lane.b32.xlu0 %v1169, 112
        %v1301 = vpop.permute.xlu0 %1300
        %1303 = vrot.lane.b32.xlu0 %v1170, 112
        %v1304 = vpop.permute.xlu0 %1303
        %v1306 = vsel %vm1179, %v1301, 0
        %v1309 = vsel %vm1179, %v1304, 0
        %1311 = vmatprep.subr.bf16.mxu0 0
        %1312 = vmatpush1.bf16.xpose.msra.mxu0 %v1309
        %1313 = vmatprep.subr.bf16.mxu0 0
        %1314 = vmatpush1.bf16.xpose.msra.mxu0 0
        %1315 = vmatprep.subr.bf16.mxu0 0
        %1316 = vmatpush1.bf16.xpose.msra.mxu0 0
        %1317 = vmatprep.subr.bf16.mxu0 0
        %1318 = vmatpush1.bf16.xpose.msra.mxu0 0
        %1319 = vmatprep.subr.bf16.mxu0 0
        %1320 = vmatpush1.bf16.xpose.msra.mxu0 0
        %1321 = vmatprep.subr.bf16.mxu0 0
        %1322 = vmatpush1.bf16.xpose.msra.mxu0 0
        %1323 = vmatprep.subr.bf16.mxu0 0
        %1324 = vmatpush1.bf16.xpose.msra.mxu0 0
        %1325 = vmatprep.subr.bf16.mxu0 0
        %1326 = vmatpush1.bf16.xpose.msra.mxu0 0
        %1327 = vmatprep.subr.bf16.mxu0 0
        %1328 = vmatpush1.bf16.xpose.msra.mxu0 0
        %1329 = vmatprep.subr.bf16.mxu0 0
        %1330 = vmatpush1.bf16.xpose.msra.mxu0 0
        %1331 = vmatprep.subr.bf16.mxu0 0
        %1332 = vmatpush1.bf16.xpose.msra.mxu0 0
        %1333 = vmatprep.subr.bf16.mxu0 0
        %1334 = vmatpush1.bf16.xpose.msra.mxu0 0
        %1335 = vmatprep.subr.bf16.mxu0 0
        %1336 = vmatpush1.bf16.xpose.msra.mxu0 0
        %1337 = vmatprep.subr.bf16.mxu0 0
        %1338 = vmatpush1.bf16.xpose.msra.mxu0 0
        %1339 = vmatprep.subr.bf16.mxu0 0
        %1340 = vmatpush1.bf16.xpose.msra.mxu0 0
        %1341 = vmatprep.subr.bf16.mxu0 0
        %1342 = vmatpush1.bf16.xpose.msra.mxu0 0
        %1343 = vmatprep.mubr.bf16.mxu0 0
        %1344 = vmatmul.mubr.bf16.gmra.mrb[0].mxu0 %v1306
        %v1345 = vpop.f32.mrb[0].mxu0
        %v1346 = vadd.f32 %v1177, %v1345
        %v1347 = vpop.f32.mrb[0].mxu0
        %v1348 = vpop.f32.mrb[0].mxu0
        %v1349 = vadd.f32 %v1177, %v1348
        %v1350 = vpop.f32.mrb[0].mxu0
        %1351 = vdwg.mxu0
        %v1352 = vsel %vm1227, %v1346, -inf
        %1353 = vmax.xlane.f32.xlu0 %v1352
        %v1354 = vpop.xlane.xlu0 %1353
        %v1355 = vsel %vm1227, %v1349, -inf
        %1356 = vmax.xlane.f32.xlu0 %v1355
        %v1357 = vpop.xlane.xlu0 %1356
        %v1358 = vsub.f32 %v1346, %v1354
        %v1359 = vsub.f32 %v1349, %v1357
        %v1360 = vmul.f32 %v1358, 1.442695
        %v1361 = vpow.pop %v1360
        %v1362 = vmul.f32 %v1359, 1.442695
        %v1363 = vpow.pop %v1362
        %v1364 = vsel %vm1227, %v1361, 0.0
        %1365 = vadd.xlane.f32.xlu0 %v1364
        %v1366 = vpop.xlane.xlu0 %1365
        %v1367 = vsel %vm1227, %v1363, 0.0
        %1368 = vadd.xlane.f32.xlu0 %v1367
        %v1369 = vpop.xlane.xlu0 %1368
        %v1370 = vrcp.pop %v1366
        %v1371 = vrcp.pop %v1369
        %v1372 = vmul.f32 %v1361, %v1370
        %v1373 = vmul.f32 %v1363, %v1371
        %v1374 = vpack.c.bf16 %v1373, %v1372
        %1376 = vrot.lane.b32.xlu0 %v1171, 112
        %v1377 = vpop.permute.xlu0 %1376
        %v1379 = vsel %vm1227, %v1374, 0
        %v1382 = vsel %vm1254, %v1377, 0
        %1384 = vmatprep.subr.bf16.mxu0 0
        %1385 = vmatpush1.bf16.msra.mxu0 %v1382
        %1386 = vmatprep.subr.bf16.mxu0 0
        %1387 = vmatpush1.bf16.msra.mxu0 0
        %1388 = vmatprep.subr.bf16.mxu0 0
        %1389 = vmatpush1.bf16.msra.mxu0 0
        %1390 = vmatprep.subr.bf16.mxu0 0
        %1391 = vmatpush1.bf16.msra.mxu0 0
        %1392 = vmatprep.subr.bf16.mxu0 0
        %1393 = vmatpush1.bf16.msra.mxu0 0
        %1394 = vmatprep.subr.bf16.mxu0 0
        %1395 = vmatpush1.bf16.msra.mxu0 0
        %1396 = vmatprep.subr.bf16.mxu0 0
        %1397 = vmatpush1.bf16.msra.mxu0 0
        %1398 = vmatprep.subr.bf16.mxu0 0
        %1399 = vmatpush1.bf16.msra.mxu0 0
        %1400 = vmatprep.subr.bf16.mxu0 0
        %1401 = vmatpush1.bf16.msra.mxu0 0
        %1402 = vmatprep.subr.bf16.mxu0 0
        %1403 = vmatpush1.bf16.msra.mxu0 0
        %1404 = vmatprep.subr.bf16.mxu0 0
        %1405 = vmatpush1.bf16.msra.mxu0 0
        %1406 = vmatprep.subr.bf16.mxu0 0
        %1407 = vmatpush1.bf16.msra.mxu0 0
        %1408 = vmatprep.subr.bf16.mxu0 0
        %1409 = vmatpush1.bf16.msra.mxu0 0
        %1410 = vmatprep.subr.bf16.mxu0 0
        %1411 = vmatpush1.bf16.msra.mxu0 0
        %1412 = vmatprep.subr.bf16.mxu0 0
        %1413 = vmatpush1.bf16.msra.mxu0 0
        %1414 = vmatprep.subr.bf16.mxu0 0
        %1415 = vmatpush1.bf16.msra.mxu0 0
        %1416 = vmatprep.mubr.bf16.mxu0 0
        %1417 = vmatmul.mubr.bf16.gmra.mrb[0].mxu0 %v1379
        %v1418 = vpop.f32.mrb[0].mxu0
        %v1419 = vadd.f32 0.0, %v1418
        %v1420 = vpop.f32.mrb[0].mxu0
        %v1421 = vpop.f32.mrb[0].mxu0
        %v1422 = vadd.f32 0.0, %v1421
        %v1423 = vpop.f32.mrb[0].mxu0
        %1424 = vdwg.mxu0
        %1425 = vrot.lane.b32.xlu0 %v1169, 96
        %v1426 = vpop.permute.xlu0 %1425
        %1427 = vrot.lane.b32.xlu0 %v1170, 96
        %v1428 = vpop.permute.xlu0 %1427
        %v1430 = vsel %vm1179, %v1426, 0
        %v1433 = vsel %vm1179, %v1428, 0
        %1435 = vmatprep.subr.bf16.mxu0 0
        %1436 = vmatpush1.bf16.xpose.msra.mxu0 %v1433
        %1437 = vmatprep.subr.bf16.mxu0 0
        %1438 = vmatpush1.bf16.xpose.msra.mxu0 0
        %1439 = vmatprep.subr.bf16.mxu0 0
        %1440 = vmatpush1.bf16.xpose.msra.mxu0 0
        %1441 = vmatprep.subr.bf16.mxu0 0
        %1442 = vmatpush1.bf16.xpose.msra.mxu0 0
        %1443 = vmatprep.subr.bf16.mxu0 0
        %1444 = vmatpush1.bf16.xpose.msra.mxu0 0
        %1445 = vmatprep.subr.bf16.mxu0 0
        %1446 = vmatpush1.bf16.xpose.msra.mxu0 0
        %1447 = vmatprep.subr.bf16.mxu0 0
        %1448 = vmatpush1.bf16.xpose.msra.mxu0 0
        %1449 = vmatprep.subr.bf16.mxu0 0
        %1450 = vmatpush1.bf16.xpose.msra.mxu0 0
        %1451 = vmatprep.subr.bf16.mxu0 0
        %1452 = vmatpush1.bf16.xpose.msra.mxu0 0
        %1453 = vmatprep.subr.bf16.mxu0 0
        %1454 = vmatpush1.bf16.xpose.msra.mxu0 0
        %1455 = vmatprep.subr.bf16.mxu0 0
        %1456 = vmatpush1.bf16.xpose.msra.mxu0 0
        %1457 = vmatprep.subr.bf16.mxu0 0
        %1458 = vmatpush1.bf16.xpose.msra.mxu0 0
        %1459 = vmatprep.subr.bf16.mxu0 0
        %1460 = vmatpush1.bf16.xpose.msra.mxu0 0
        %1461 = vmatprep.subr.bf16.mxu0 0
        %1462 = vmatpush1.bf16.xpose.msra.mxu0 0
        %1463 = vmatprep.subr.bf16.mxu0 0
        %1464 = vmatpush1.bf16.xpose.msra.mxu0 0
        %1465 = vmatprep.subr.bf16.mxu0 0
        %1466 = vmatpush1.bf16.xpose.msra.mxu0 0
        %1467 = vmatprep.mubr.bf16.mxu0 0
        %1468 = vmatmul.mubr.bf16.gmra.mrb[0].mxu0 %v1430
        %v1469 = vpop.f32.mrb[0].mxu0
        %v1470 = vadd.f32 %v1177, %v1469
        %v1471 = vpop.f32.mrb[0].mxu0
        %v1472 = vpop.f32.mrb[0].mxu0
        %v1473 = vadd.f32 %v1177, %v1472
        %v1474 = vpop.f32.mrb[0].mxu0
        %1475 = vdwg.mxu0
        %v1476 = vsel %vm1227, %v1470, -inf
        %1477 = vmax.xlane.f32.xlu0 %v1476
        %v1478 = vpop.xlane.xlu0 %1477
        %v1479 = vsel %vm1227, %v1473, -inf
        %1480 = vmax.xlane.f32.xlu0 %v1479
        %v1481 = vpop.xlane.xlu0 %1480
        %v1482 = vsub.f32 %v1470, %v1478
        %v1483 = vsub.f32 %v1473, %v1481
        %v1484 = vmul.f32 %v1482, 1.442695
        %v1485 = vpow.pop %v1484
        %v1486 = vmul.f32 %v1483, 1.442695
        %v1487 = vpow.pop %v1486
        %v1488 = vsel %vm1227, %v1485, 0.0
        %1489 = vadd.xlane.f32.xlu0 %v1488
        %v1490 = vpop.xlane.xlu0 %1489
        %v1491 = vsel %vm1227, %v1487, 0.0
        %1492 = vadd.xlane.f32.xlu0 %v1491
        %v1493 = vpop.xlane.xlu0 %1492
        %v1494 = vrcp.pop %v1490
        %v1495 = vrcp.pop %v1493
        %v1496 = vmul.f32 %v1485, %v1494
        %v1497 = vmul.f32 %v1487, %v1495
        %v1498 = vpack.c.bf16 %v1497, %v1496
        %1499 = vrot.lane.b32.xlu0 %v1171, 96
        %v1500 = vpop.permute.xlu0 %1499
        %v1502 = vsel %vm1227, %v1498, 0
        %v1505 = vsel %vm1254, %v1500, 0
        %1507 = vmatprep.subr.bf16.mxu0 0
        %1508 = vmatpush1.bf16.msra.mxu0 %v1505
        %1509 = vmatprep.subr.bf16.mxu0 0
        %1510 = vmatpush1.bf16.msra.mxu0 0
        %1511 = vmatprep.subr.bf16.mxu0 0
        %1512 = vmatpush1.bf16.msra.mxu0 0
        %1513 = vmatprep.subr.bf16.mxu0 0
        %1514 = vmatpush1.bf16.msra.mxu0 0
        %1515 = vmatprep.subr.bf16.mxu0 0
        %1516 = vmatpush1.bf16.msra.mxu0 0
        %1517 = vmatprep.subr.bf16.mxu0 0
        %1518 = vmatpush1.bf16.msra.mxu0 0
        %1519 = vmatprep.subr.bf16.mxu0 0
        %1520 = vmatpush1.bf16.msra.mxu0 0
        %1521 = vmatprep.subr.bf16.mxu0 0
        %1522 = vmatpush1.bf16.msra.mxu0 0
        %1523 = vmatprep.subr.bf16.mxu0 0
        %1524 = vmatpush1.bf16.msra.mxu0 0
        %1525 = vmatprep.subr.bf16.mxu0 0
        %1526 = vmatpush1.bf16.msra.mxu0 0
        %1527 = vmatprep.subr.bf16.mxu0 0
        %1528 = vmatpush1.bf16.msra.mxu0 0
        %1529 = vmatprep.subr.bf16.mxu0 0
        %1530 = vmatpush1.bf16.msra.mxu0 0
        %1531 = vmatprep.subr.bf16.mxu0 0
        %1532 = vmatpush1.bf16.msra.mxu0 0
        %1533 = vmatprep.subr.bf16.mxu0 0
        %1534 = vmatpush1.bf16.msra.mxu0 0
        %1535 = vmatprep.subr.bf16.mxu0 0
        %1536 = vmatpush1.bf16.msra.mxu0 0
        %1537 = vmatprep.subr.bf16.mxu0 0
        %1538 = vmatpush1.bf16.msra.mxu0 0
        %1539 = vmatprep.mubr.bf16.mxu0 0
        %1540 = vmatmul.mubr.bf16.gmra.mrb[0].mxu0 %v1502
        %v1541 = vpop.f32.mrb[0].mxu0
        %v1542 = vadd.f32 0.0, %v1541
        %v1543 = vpop.f32.mrb[0].mxu0
        %v1544 = vpop.f32.mrb[0].mxu0
        %v1545 = vadd.f32 0.0, %v1544
        %v1546 = vpop.f32.mrb[0].mxu0
        %1547 = vdwg.mxu0
        %1548 = vrot.lane.b32.xlu0 %v1169, 80
        %v1549 = vpop.permute.xlu0 %1548
        %1550 = vrot.lane.b32.xlu0 %v1170, 80
        %v1551 = vpop.permute.xlu0 %1550
        %v1553 = vsel %vm1179, %v1549, 0
        %v1556 = vsel %vm1179, %v1551, 0
        %1558 = vmatprep.subr.bf16.mxu0 0
        %1559 = vmatpush1.bf16.xpose.msra.mxu0 %v1556
        %1560 = vmatprep.subr.bf16.mxu0 0
        %1561 = vmatpush1.bf16.xpose.msra.mxu0 0
        %1562 = vmatprep.subr.bf16.mxu0 0
        %1563 = vmatpush1.bf16.xpose.msra.mxu0 0
        %1564 = vmatprep.subr.bf16.mxu0 0
        %1565 = vmatpush1.bf16.xpose.msra.mxu0 0
        %1566 = vmatprep.subr.bf16.mxu0 0
        %1567 = vmatpush1.bf16.xpose.msra.mxu0 0
        %1568 = vmatprep.subr.bf16.mxu0 0
        %1569 = vmatpush1.bf16.xpose.msra.mxu0 0
        %1570 = vmatprep.subr.bf16.mxu0 0
        %1571 = vmatpush1.bf16.xpose.msra.mxu0 0
        %1572 = vmatprep.subr.bf16.mxu0 0
        %1573 = vmatpush1.bf16.xpose.msra.mxu0 0
        %1574 = vmatprep.subr.bf16.mxu0 0
        %1575 = vmatpush1.bf16.xpose.msra.mxu0 0
        %1576 = vmatprep.subr.bf16.mxu0 0
        %1577 = vmatpush1.bf16.xpose.msra.mxu0 0
        %1578 = vmatprep.subr.bf16.mxu0 0
        %1579 = vmatpush1.bf16.xpose.msra.mxu0 0
        %1580 = vmatprep.subr.bf16.mxu0 0
        %1581 = vmatpush1.bf16.xpose.msra.mxu0 0
        %1582 = vmatprep.subr.bf16.mxu0 0
        %1583 = vmatpush1.bf16.xpose.msra.mxu0 0
        %1584 = vmatprep.subr.bf16.mxu0 0
        %1585 = vmatpush1.bf16.xpose.msra.mxu0 0
        %1586 = vmatprep.subr.bf16.mxu0 0
        %1587 = vmatpush1.bf16.xpose.msra.mxu0 0
        %1588 = vmatprep.subr.bf16.mxu0 0
        %1589 = vmatpush1.bf16.xpose.msra.mxu0 0
        %1590 = vmatprep.mubr.bf16.mxu0 0
        %1591 = vmatmul.mubr.bf16.gmra.mrb[0].mxu0 %v1553
        %v1592 = vpop.f32.mrb[0].mxu0
        %v1593 = vadd.f32 %v1177, %v1592
        %v1594 = vpop.f32.mrb[0].mxu0
        %v1595 = vpop.f32.mrb[0].mxu0
        %v1596 = vadd.f32 %v1177, %v1595
        %v1597 = vpop.f32.mrb[0].mxu0
        %1598 = vdwg.mxu0
        %v1599 = vsel %vm1227, %v1593, -inf
        %1600 = vmax.xlane.f32.xlu0 %v1599
        %v1601 = vpop.xlane.xlu0 %1600
        %v1602 = vsel %vm1227, %v1596, -inf
        %1603 = vmax.xlane.f32.xlu0 %v1602
        %v1604 = vpop.xlane.xlu0 %1603
        %v1605 = vsub.f32 %v1593, %v1601
        %v1606 = vsub.f32 %v1596, %v1604
        %v1607 = vmul.f32 %v1605, 1.442695
        %v1608 = vpow.pop %v1607
        %v1609 = vmul.f32 %v1606, 1.442695
        %v1610 = vpow.pop %v1609
        %v1611 = vsel %vm1227, %v1608, 0.0
        %1612 = vadd.xlane.f32.xlu0 %v1611
        %v1613 = vpop.xlane.xlu0 %1612
        %v1614 = vsel %vm1227, %v1610, 0.0
        %1615 = vadd.xlane.f32.xlu0 %v1614
        %v1616 = vpop.xlane.xlu0 %1615
        %v1617 = vrcp.pop %v1613
        %v1618 = vrcp.pop %v1616
        %v1619 = vmul.f32 %v1608, %v1617
        %v1620 = vmul.f32 %v1610, %v1618
        %v1621 = vpack.c.bf16 %v1620, %v1619
        %1622 = vrot.lane.b32.xlu0 %v1171, 80
        %v1623 = vpop.permute.xlu0 %1622
        %v1625 = vsel %vm1227, %v1621, 0
        %v1628 = vsel %vm1254, %v1623, 0
        %1630 = vmatprep.subr.bf16.mxu0 0
        %1631 = vmatpush1.bf16.msra.mxu0 %v1628
        %1632 = vmatprep.subr.bf16.mxu0 0
        %1633 = vmatpush1.bf16.msra.mxu0 0
        %1634 = vmatprep.subr.bf16.mxu0 0
        %1635 = vmatpush1.bf16.msra.mxu0 0
        %1636 = vmatprep.subr.bf16.mxu0 0
        %1637 = vmatpush1.bf16.msra.mxu0 0
        %1638 = vmatprep.subr.bf16.mxu0 0
        %1639 = vmatpush1.bf16.msra.mxu0 0
        %1640 = vmatprep.subr.bf16.mxu0 0
        %1641 = vmatpush1.bf16.msra.mxu0 0
        %1642 = vmatprep.subr.bf16.mxu0 0
        %1643 = vmatpush1.bf16.msra.mxu0 0
        %1644 = vmatprep.subr.bf16.mxu0 0
        %1645 = vmatpush1.bf16.msra.mxu0 0
        %1646 = vmatprep.subr.bf16.mxu0 0
        %1647 = vmatpush1.bf16.msra.mxu0 0
        %1648 = vmatprep.subr.bf16.mxu0 0
        %1649 = vmatpush1.bf16.msra.mxu0 0
        %1650 = vmatprep.subr.bf16.mxu0 0
        %1651 = vmatpush1.bf16.msra.mxu0 0
        %1652 = vmatprep.subr.bf16.mxu0 0
        %1653 = vmatpush1.bf16.msra.mxu0 0
        %1654 = vmatprep.subr.bf16.mxu0 0
        %1655 = vmatpush1.bf16.msra.mxu0 0
        %1656 = vmatprep.subr.bf16.mxu0 0
        %1657 = vmatpush1.bf16.msra.mxu0 0
        %1658 = vmatprep.subr.bf16.mxu0 0
        %1659 = vmatpush1.bf16.msra.mxu0 0
        %1660 = vmatprep.subr.bf16.mxu0 0
        %1661 = vmatpush1.bf16.msra.mxu0 0
        %1662 = vmatprep.mubr.bf16.mxu0 0
        %1663 = vmatmul.mubr.bf16.gmra.mrb[0].mxu0 %v1625
        %v1664 = vpop.f32.mrb[0].mxu0
        %v1665 = vadd.f32 0.0, %v1664
        %v1666 = vpop.f32.mrb[0].mxu0
        %v1667 = vpop.f32.mrb[0].mxu0
        %v1668 = vadd.f32 0.0, %v1667
        %v1669 = vpop.f32.mrb[0].mxu0
        %1670 = vdwg.mxu0
        %1673 = vrot.lane.b32.xlu0 %v1419, 16
        %v1674 = vpop.permute.xlu0 %1673
        %1675 = vrot.lane.b32.xlu0 %v1422, 16
        %v1676 = vpop.permute.xlu0 %1675
        %1681 = vrot.lane.b32.xlu0 %v1542, 32
        %v1682 = vpop.permute.xlu0 %1681
        %1683 = vrot.lane.b32.xlu0 %v1545, 32
        %v1684 = vpop.permute.xlu0 %1683
        %1689 = vrot.lane.b32.xlu0 %v1665, 48
        %v1690 = vpop.permute.xlu0 %1689
        %1691 = vrot.lane.b32.xlu0 %v1668, 48
        %v1692 = vpop.permute.xlu0 %1691
        %v1695 = vsel %vm1179, %v1293, %v1674
        %v1696 = vsel %vm1179, %v1296, %v1676
        %vm1697 = vcmask 261120
        %v1698 = vsel %vm1697, %v1695, %v1682
        %v1699 = vsel %vm1697, %v1696, %v1684
        %vm1700 = vcmask 392192
        %v1701 = vsel %vm1700, %v1698, %v1690
        %v1702 = vsel %vm1700, %v1699, %v1692
        %v1703 = vpack.c.bf16 %v1702, %v1701
        %v1704 = vld [vmem:[%s876] sm:$0xf]
        %v1705 = vld [vmem:[%s876 + $0x4] sm:$0xf]
        %v1706 = vld [vmem:[%s876 + $0x8] sm:$0xf]
        %v1707 = vld [vmem:[%s876 + $0xc] sm:$0xf]
        %v1708 = vld [vmem:[%s876 + $0x10] sm:$0xf]
        %v1709 = vld [vmem:[%s876 + $0x14] sm:$0xf]
        %v1710 = vld [vmem:[%s876 + $0x18] sm:$0xf]
        %v1711 = vld [vmem:[%s876 + $0x1c] sm:$0xf]
        %v1712 = vld [vmem:[%s879] sm:$0x1]
        %v1714 = vlaneseq
        %v1715 = vshrl.u32 %v1714, 7
        %v1716 = vsub.s32 0, %v1715
        %v1717 = vrot.slane %v1712, %v1716
        %v1727 = vunpack.c.l.b16 %v1704
        %v1728 = vunpack.c.l.b16 %v1705
        %v1729 = vunpack.c.l.b16 %v1706
        %v1730 = vunpack.c.l.b16 %v1707
        %v1731 = vunpack.c.l.b16 %v1708
        %v1732 = vunpack.c.l.b16 %v1709
        %v1733 = vunpack.c.l.b16 %v1710
        %v1734 = vunpack.c.l.b16 %v1711
        %v1735 = vpack.c.b16 %v1728, %v1727
        %v1736 = vpack.c.b16 %v1730, %v1729
        %v1737 = vpack.c.b16 %v1732, %v1731
        %v1738 = vpack.c.b16 %v1734, %v1733
        %v1744 = vsel %vm963, %v1703, 0
        %1746 = vmatprep.subr.bf16.mxu0 0
        %1747 = vmatpush1.bf16.msra.mxu0 %v1735
        %1748 = vmatprep.subr.bf16.mxu0 0
        %1749 = vmatpush1.bf16.msra.mxu0 %v1736
        %1750 = vmatprep.subr.bf16.mxu0 0
        %1751 = vmatpush1.bf16.msra.mxu0 %v1737
        %1752 = vmatprep.subr.bf16.mxu0 0
        %1753 = vmatpush1.bf16.msra.mxu0 %v1738
        %1754 = vmatprep.subr.bf16.mxu0 0
        %1755 = vmatpush1.bf16.msra.mxu0 0
        %1756 = vmatprep.subr.bf16.mxu0 0
        %1757 = vmatpush1.bf16.msra.mxu0 0
        %1758 = vmatprep.subr.bf16.mxu0 0
        %1759 = vmatpush1.bf16.msra.mxu0 0
        %1760 = vmatprep.subr.bf16.mxu0 0
        %1761 = vmatpush1.bf16.msra.mxu0 0
        %1762 = vmatprep.subr.bf16.mxu0 0
        %1763 = vmatpush1.bf16.msra.mxu0 0
        %1764 = vmatprep.subr.bf16.mxu0 0
        %1765 = vmatpush1.bf16.msra.mxu0 0
        %1766 = vmatprep.subr.bf16.mxu0 0
        %1767 = vmatpush1.bf16.msra.mxu0 0
        %1768 = vmatprep.subr.bf16.mxu0 0
        %1769 = vmatpush1.bf16.msra.mxu0 0
        %1770 = vmatprep.subr.bf16.mxu0 0
        %1771 = vmatpush1.bf16.msra.mxu0 0
        %1772 = vmatprep.subr.bf16.mxu0 0
        %1773 = vmatpush1.bf16.msra.mxu0 0
        %1774 = vmatprep.subr.bf16.mxu0 0
        %1775 = vmatpush1.bf16.msra.mxu0 0
        %1776 = vmatprep.subr.bf16.mxu0 0
        %1777 = vmatpush1.bf16.msra.mxu0 0
        %1778 = vmatprep.mubr.bf16.mxu0 0
        %1779 = vmatmul.mubr.bf16.gmra.mrb[0].mxu0 %v1744
        %v1780 = vpop.f32.mrb[0].mxu0
        %v1781 = vadd.f32 %v1717, %v1780
        %v1782 = vpop.f32.mrb[0].mxu0
        %v1783 = vpop.f32.mrb[0].mxu0
        %v1784 = vadd.f32 %v1717, %v1783
        %v1785 = vpop.f32.mrb[0].mxu0
        %1786 = vdwg.mxu0
        %v1787 = vadd.f32 %v1781, %v919
        %v1788 = vadd.f32 %v1784, %v920
        %v1789 = vld [vmem:[%s882] sm:$0x1]
        %v1790 = vld [vmem:[%s885] sm:$0x1]
        %v1791 = vsel %vm963, %v1787, 0.0
        %1792 = vadd.xlane.f32.xlu0 %v1791
        %v1793 = vpop.xlane.xlu0 %1792
        %v1794 = vsel %vm963, %v1788, 0.0
        %1795 = vadd.xlane.f32.xlu0 %v1794
        %v1796 = vpop.xlane.xlu0 %1795
        %v1797 = vrcp.pop 64.0
        %v1798 = vmul.f32 %v1793, %v1797
        %v1799 = vmul.f32 %v1796, %v1797
        %v1800 = vsub.f32 %v1787, %v1798
        %v1801 = vsub.f32 %v1788, %v1799
        %v1802 = vmul.f32 %v1800, %v1800
        %v1803 = vmul.f32 %v1801, %v1801
        %v1804 = vsel %vm963, %v1802, 0.0
        %1805 = vadd.xlane.f32.xlu0 %v1804
        %v1806 = vpop.xlane.xlu0 %1805
        %v1807 = vsel %vm963, %v1803, 0.0
        %1808 = vadd.xlane.f32.xlu0 %v1807
        %v1809 = vpop.xlane.xlu0 %1808
        %v1810 = vmul.f32 %v1806, %v1797
        %v1811 = vmul.f32 %v1809, %v1797
        %v1812 = vadd.f32 %v1810, 1e-12
        %v1813 = vadd.f32 %v1811, 1e-12
        %v1814 = vrsqrt.pop %v1812
        %v1815 = vrsqrt.pop %v1813
        %v1816 = vmul.f32 %v1800, %v1814
        %v1817 = vmul.f32 %v1801, %v1815
        %v1819 = vlaneseq
        %v1820 = vshrl.u32 %v1819, 7
        %v1821 = vsub.s32 0, %v1820
        %v1822 = vrot.slane %v1789, %v1821
        %v1824 = vmul.f32 %v1816, %v1822
        %v1825 = vmul.f32 %v1817, %v1822
        %v1827 = vlaneseq
        %v1828 = vshrl.u32 %v1827, 7
        %v1829 = vsub.s32 0, %v1828
        %v1830 = vrot.slane %v1790, %v1829
        %v1832 = vadd.f32 %v1824, %v1830
        %v1833 = vadd.f32 %v1825, %v1830
        %v1834 = vpack.c.bf16 %v1833, %v1832
        %v1835 = vld [vmem:[%s890] sm:$0xff]
        %v1836 = vld [vmem:[%s890 + $0x8] sm:$0xff]
        %v1837 = vld [vmem:[%s890 + $0x10] sm:$0xff]
        %v1838 = vld [vmem:[%s890 + $0x18] sm:$0xff]
        %v1839 = vld [vmem:[%s890 + $0x20] sm:$0xff]
        %v1840 = vld [vmem:[%s890 + $0x28] sm:$0xff]
        %v1841 = vld [vmem:[%s890 + $0x30] sm:$0xff]
        %v1842 = vld [vmem:[%s890 + $0x38] sm:$0xff]
        %v1843 = vld [vmem:[%s894] sm:$0x3]
        %v1845 = vlaneseq
        %v1846 = vshrl.u32 %v1845, 7
        %v1847 = vsub.s32 0, %v1846
        %v1848 = vrot.slane %v1843, %v1847
        %v1849 = vlaneseq
        %v1850 = vshrl.u32 %v1849, 7
        %v1851 = vsub.s32 1, %v1850
        %v1852 = vrot.slane %v1843, %v1851
        %v1863 = vunpack.c.l.b16 %v1835
        %v1864 = vunpack.c.h.b16 %v1835
        %v1865 = vunpack.c.l.b16 %v1836
        %v1866 = vunpack.c.h.b16 %v1836
        %v1867 = vunpack.c.l.b16 %v1837
        %v1868 = vunpack.c.h.b16 %v1837
        %v1869 = vunpack.c.l.b16 %v1838
        %v1870 = vunpack.c.h.b16 %v1838
        %v1871 = vunpack.c.l.b16 %v1839
        %v1872 = vunpack.c.h.b16 %v1839
        %v1873 = vunpack.c.l.b16 %v1840
        %v1874 = vunpack.c.h.b16 %v1840
        %v1875 = vunpack.c.l.b16 %v1841
        %v1876 = vunpack.c.h.b16 %v1841
        %v1877 = vunpack.c.l.b16 %v1842
        %v1878 = vunpack.c.h.b16 %v1842
        %v1879 = vpack.c.b16 %v1865, %v1863
        %v1880 = vpack.c.b16 %v1866, %v1864
        %v1881 = vpack.c.b16 %v1869, %v1867
        %v1882 = vpack.c.b16 %v1870, %v1868
        %v1883 = vpack.c.b16 %v1873, %v1871
        %v1884 = vpack.c.b16 %v1874, %v1872
        %v1885 = vpack.c.b16 %v1877, %v1875
        %v1886 = vpack.c.b16 %v1878, %v1876
        %v1896 = vsel %vm963, %v1834, 0
        %1898 = vmatprep.subr.bf16.mxu0 %v1880
        %1899 = vmatpush1.bf16.msra.mxu0 %v1879
        %1900 = vmatprep.subr.bf16.mxu0 %v1882
        %1901 = vmatpush1.bf16.msra.mxu0 %v1881
        %1902 = vmatprep.subr.bf16.mxu0 %v1884
        %1903 = vmatpush1.bf16.msra.mxu0 %v1883
        %1904 = vmatprep.subr.bf16.mxu0 %v1886
        %1905 = vmatpush1.bf16.msra.mxu0 %v1885
        %1906 = vmatprep.subr.bf16.mxu0 0
        %1907 = vmatpush1.bf16.msra.mxu0 0
        %1908 = vmatprep.subr.bf16.mxu0 0
        %1909 = vmatpush1.bf16.msra.mxu0 0
        %1910 = vmatprep.subr.bf16.mxu0 0
        %1911 = vmatpush1.bf16.msra.mxu0 0
        %1912 = vmatprep.subr.bf16.mxu0 0
        %1913 = vmatpush1.bf16.msra.mxu0 0
        %1914 = vmatprep.subr.bf16.mxu0 0
        %1915 = vmatpush1.bf16.msra.mxu0 0
        %1916 = vmatprep.subr.bf16.mxu0 0
        %1917 = vmatpush1.bf16.msra.mxu0 0
        %1918 = vmatprep.subr.bf16.mxu0 0
        %1919 = vmatpush1.bf16.msra.mxu0 0
        %1920 = vmatprep.subr.bf16.mxu0 0
        %1921 = vmatpush1.bf16.msra.mxu0 0
        %1922 = vmatprep.subr.bf16.mxu0 0
        %1923 = vmatpush1.bf16.msra.mxu0 0
        %1924 = vmatprep.subr.bf16.mxu0 0
        %1925 = vmatpush1.bf16.msra.mxu0 0
        %1926 = vmatprep.subr.bf16.mxu0 0
        %1927 = vmatpush1.bf16.msra.mxu0 0
        %1928 = vmatprep.subr.bf16.mxu0 0
        %1929 = vmatpush1.bf16.msra.mxu0 0
        %1930 = vmatprep.mubr.bf16.mxu0 0
        %1931 = vmatmul.mubr.bf16.gmra.mrb[0].mxu0 %v1896
        %v1932 = vpop.f32.mrb[0].mxu0
        %v1933 = vadd.f32 %v1848, %v1932
        %v1934 = vpop.f32.mrb[0].mxu0
        %v1935 = vadd.f32 %v1852, %v1934
        %v1936 = vpop.f32.mrb[0].mxu0
        %v1937 = vadd.f32 %v1848, %v1936
        %v1938 = vpop.f32.mrb[0].mxu0
        %v1939 = vadd.f32 %v1852, %v1938
        %1940 = vdwg.mxu0
        %v1941 = vmul.f32 %v1933, %v1933
        %v1942 = vmul.f32 %v1935, %v1935
        %v1943 = vmul.f32 %v1937, %v1937
        %v1944 = vmul.f32 %v1939, %v1939
        %v1945 = vmul.f32 %v1933, %v1941
        %v1946 = vmul.f32 %v1935, %v1942
        %v1947 = vmul.f32 %v1937, %v1943
        %v1948 = vmul.f32 %v1939, %v1944
        %v1949 = vmul.f32 %v1945, 0.044715
        %v1950 = vmul.f32 %v1946, 0.044715
        %v1951 = vmul.f32 %v1947, 0.044715
        %v1952 = vmul.f32 %v1948, 0.044715
        %v1953 = vadd.f32 %v1933, %v1949
        %v1954 = vadd.f32 %v1935, %v1950
        %v1955 = vadd.f32 %v1937, %v1951
        %v1956 = vadd.f32 %v1939, %v1952
        %v1957 = vmul.f32 %v1953, 0.7978846
        %v1958 = vmul.f32 %v1954, 0.7978846
        %v1959 = vmul.f32 %v1955, 0.7978846
        %v1960 = vmul.f32 %v1956, 0.7978846
        %v1961 = vtanh.pop %v1957
        %v1962 = vtanh.pop %v1958
        %v1963 = vtanh.pop %v1959
        %v1964 = vtanh.pop %v1960
        %v1965 = vadd.f32 %v1961, 1.0
        %v1966 = vadd.f32 %v1962, 1.0
        %v1967 = vadd.f32 %v1963, 1.0
        %v1968 = vadd.f32 %v1964, 1.0
        %v1969 = vmul.f32 %v1965, 0.5
        %v1970 = vmul.f32 %v1966, 0.5
        %v1971 = vmul.f32 %v1967, 0.5
        %v1972 = vmul.f32 %v1968, 0.5
        %v1973 = vmul.f32 %v1933, %v1969
        %v1974 = vmul.f32 %v1935, %v1970
        %v1975 = vmul.f32 %v1937, %v1971
        %v1976 = vmul.f32 %v1939, %v1972
        %v1977 = vpack.c.bf16 %v1975, %v1973
        %v1978 = vpack.c.bf16 %v1976, %v1974
        %v1979 = vld [vmem:[%s899] sm:$0xf]
        %v1980 = vld [vmem:[%s899 + $0x4] sm:$0xf]
        %v1981 = vld [vmem:[%s899 + $0x8] sm:$0xf]
        %v1982 = vld [vmem:[%s899 + $0xc] sm:$0xf]
        %v1983 = vld [vmem:[%s899 + $0x10] sm:$0xf]
        %v1984 = vld [vmem:[%s899 + $0x14] sm:$0xf]
        %v1985 = vld [vmem:[%s899 + $0x18] sm:$0xf]
        %v1986 = vld [vmem:[%s899 + $0x1c] sm:$0xf]
        %v1987 = vld [vmem:[%s899 + $0x20] sm:$0xf]
        %v1988 = vld [vmem:[%s899 + $0x24] sm:$0xf]
        %v1989 = vld [vmem:[%s899 + $0x28] sm:$0xf]
        %v1990 = vld [vmem:[%s899 + $0x2c] sm:$0xf]
        %v1991 = vld [vmem:[%s899 + $0x30] sm:$0xf]
        %v1992 = vld [vmem:[%s899 + $0x34] sm:$0xf]
        %v1993 = vld [vmem:[%s899 + $0x38] sm:$0xf]
        %v1994 = vld [vmem:[%s899 + $0x3c] sm:$0xf]
        %v1995 = vld [vmem:[%s899 + $0x40] sm:$0xf]
        %v1996 = vld [vmem:[%s899 + $0x44] sm:$0xf]
        %v1997 = vld [vmem:[%s899 + $0x48] sm:$0xf]
        %v1998 = vld [vmem:[%s899 + $0x4c] sm:$0xf]
        %v1999 = vld [vmem:[%s899 + $0x50] sm:$0xf]
        %v2000 = vld [vmem:[%s899 + $0x54] sm:$0xf]
        %v2001 = vld [vmem:[%s899 + $0x58] sm:$0xf]
        %v2002 = vld [vmem:[%s899 + $0x5c] sm:$0xf]
        %v2003 = vld [vmem:[%s899 + $0x60] sm:$0xf]
        %v2004 = vld [vmem:[%s899 + $0x64] sm:$0xf]
        %v2005 = vld [vmem:[%s899 + $0x68] sm:$0xf]
        %v2006 = vld [vmem:[%s899 + $0x6c] sm:$0xf]
        %v2007 = vld [vmem:[%s899 + $0x70] sm:$0xf]
        %v2008 = vld [vmem:[%s899 + $0x74] sm:$0xf]
        %v2009 = vld [vmem:[%s899 + $0x78] sm:$0xf]
        %v2010 = vld [vmem:[%s899 + $0x7c] sm:$0xf]
        %v2011 = vld [vmem:[%s902] sm:$0x1]
        %v2013 = vlaneseq
        %v2014 = vshrl.u32 %v2013, 7
        %v2015 = vsub.s32 0, %v2014
        %v2016 = vrot.slane %v2011, %v2015
        %v2050 = vunpack.c.l.b16 %v1979
        %v2051 = vunpack.c.l.b16 %v1980
        %v2052 = vunpack.c.l.b16 %v1981
        %v2053 = vunpack.c.l.b16 %v1982
        %v2054 = vunpack.c.l.b16 %v1983
        %v2055 = vunpack.c.l.b16 %v1984
        %v2056 = vunpack.c.l.b16 %v1985
        %v2057 = vunpack.c.l.b16 %v1986
        %v2058 = vunpack.c.l.b16 %v1987
        %v2059 = vunpack.c.l.b16 %v1988
        %v2060 = vunpack.c.l.b16 %v1989
        %v2061 = vunpack.c.l.b16 %v1990
        %v2062 = vunpack.c.l.b16 %v1991
        %v2063 = vunpack.c.l.b16 %v1992
        %v2064 = vunpack.c.l.b16 %v1993
        %v2065 = vunpack.c.l.b16 %v1994
        %v2066 = vunpack.c.l.b16 %v1995
        %v2067 = vunpack.c.l.b16 %v1996
        %v2068 = vunpack.c.l.b16 %v1997
        %v2069 = vunpack.c.l.b16 %v1998
        %v2070 = vunpack.c.l.b16 %v1999
        %v2071 = vunpack.c.l.b16 %v2000
        %v2072 = vunpack.c.l.b16 %v2001
        %v2073 = vunpack.c.l.b16 %v2002
        %v2074 = vunpack.c.l.b16 %v2003
        %v2075 = vunpack.c.l.b16 %v2004
        %v2076 = vunpack.c.l.b16 %v2005
        %v2077 = vunpack.c.l.b16 %v2006
        %v2078 = vunpack.c.l.b16 %v2007
        %v2079 = vunpack.c.l.b16 %v2008
        %v2080 = vunpack.c.l.b16 %v2009
        %v2081 = vunpack.c.l.b16 %v2010
        %v2082 = vpack.c.b16 %v2051, %v2050
        %v2083 = vpack.c.b16 %v2053, %v2052
        %v2084 = vpack.c.b16 %v2055, %v2054
        %v2085 = vpack.c.b16 %v2057, %v2056
        %v2086 = vpack.c.b16 %v2059, %v2058
        %v2087 = vpack.c.b16 %v2061, %v2060
        %v2088 = vpack.c.b16 %v2063, %v2062
        %v2089 = vpack.c.b16 %v2065, %v2064
        %v2090 = vpack.c.b16 %v2067, %v2066
        %v2091 = vpack.c.b16 %v2069, %v2068
        %v2092 = vpack.c.b16 %v2071, %v2070
        %v2093 = vpack.c.b16 %v2073, %v2072
        %v2094 = vpack.c.b16 %v2075, %v2074
        %v2095 = vpack.c.b16 %v2077, %v2076
        %v2096 = vpack.c.b16 %v2079, %v2078
        %v2097 = vpack.c.b16 %v2081, %v2080
        %2114 = vmatprep.subr.bf16.mxu0 0
        %2115 = vmatpush1.bf16.msra.mxu0 %v2082
        %2116 = vmatprep.subr.bf16.mxu0 0
        %2117 = vmatpush1.bf16.msra.mxu0 %v2083
        %2118 = vmatprep.subr.bf16.mxu0 0
        %2119 = vmatpush1.bf16.msra.mxu0 %v2084
        %2120 = vmatprep.subr.bf16.mxu0 0
        %2121 = vmatpush1.bf16.msra.mxu0 %v2085
        %2122 = vmatprep.subr.bf16.mxu0 0
        %2123 = vmatpush1.bf16.msra.mxu0 %v2086
        %2124 = vmatprep.subr.bf16.mxu0 0
        %2125 = vmatpush1.bf16.msra.mxu0 %v2087
        %2126 = vmatprep.subr.bf16.mxu0 0
        %2127 = vmatpush1.bf16.msra.mxu0 %v2088
        %2128 = vmatprep.subr.bf16.mxu0 0
        %2129 = vmatpush1.bf16.msra.mxu0 %v2089
        %2130 = vmatprep.subr.bf16.mxu0 0
        %2131 = vmatpush1.bf16.msra.mxu0 %v2090
        %2132 = vmatprep.subr.bf16.mxu0 0
        %2133 = vmatpush1.bf16.msra.mxu0 %v2091
        %2134 = vmatprep.subr.bf16.mxu0 0
        %2135 = vmatpush1.bf16.msra.mxu0 %v2092
        %2136 = vmatprep.subr.bf16.mxu0 0
        %2137 = vmatpush1.bf16.msra.mxu0 %v2093
        %2138 = vmatprep.subr.bf16.mxu0 0
        %2139 = vmatpush1.bf16.msra.mxu0 %v2094
        %2140 = vmatprep.subr.bf16.mxu0 0
        %2141 = vmatpush1.bf16.msra.mxu0 %v2095
        %2142 = vmatprep.subr.bf16.mxu0 0
        %2143 = vmatpush1.bf16.msra.mxu0 %v2096
        %2144 = vmatprep.subr.bf16.mxu0 0
        %2145 = vmatpush1.bf16.msra.mxu0 %v2097
        %2146 = vmatprep.mubr.bf16.mxu0 %v1978
        %2147 = vmatmul.mubr.bf16.gmra.mrb[0].mxu0 %v1977
        %v2148 = vpop.f32.mrb[0].mxu0
        %v2149 = vadd.f32 %v2016, %v2148
        %v2150 = vpop.f32.mrb[0].mxu0
        %v2151 = vpop.f32.mrb[0].mxu0
        %v2152 = vadd.f32 %v2016, %v2151
        %v2153 = vpop.f32.mrb[0].mxu0
        %2154 = vdwg.mxu0
        %v2155 = vadd.f32 %v2149, %v1832
        %v2156 = vadd.f32 %v2152, %v1833
        %v2157 = vld [vmem:[%s905] sm:$0x1]
        %v2158 = vld [vmem:[%s908] sm:$0x1]
        %v2159 = vsel %vm963, %v2155, 0.0
        %2160 = vadd.xlane.f32.xlu0 %v2159
        %v2161 = vpop.xlane.xlu0 %2160
        %v2162 = vsel %vm963, %v2156, 0.0
        %2163 = vadd.xlane.f32.xlu0 %v2162
        %v2164 = vpop.xlane.xlu0 %2163
        %v2165 = vmul.f32 %v2161, %v1797
        %v2166 = vmul.f32 %v2164, %v1797
        %v2167 = vsub.f32 %v2155, %v2165
        %v2168 = vsub.f32 %v2156, %v2166
        %v2169 = vmul.f32 %v2167, %v2167
        %v2170 = vmul.f32 %v2168, %v2168
        %v2171 = vsel %vm963, %v2169, 0.0
        %2172 = vadd.xlane.f32.xlu0 %v2171
        %v2173 = vpop.xlane.xlu0 %2172
        %v2174 = vsel %vm963, %v2170, 0.0
        %2175 = vadd.xlane.f32.xlu0 %v2174
        %v2176 = vpop.xlane.xlu0 %2175
        %v2177 = vmul.f32 %v2173, %v1797
        %v2178 = vmul.f32 %v2176, %v1797
        %v2179 = vadd.f32 %v2177, 1e-12
        %v2180 = vadd.f32 %v2178, 1e-12
        %v2181 = vrsqrt.pop %v2179
        %v2182 = vrsqrt.pop %v2180
        %v2183 = vmul.f32 %v2167, %v2181
        %v2184 = vmul.f32 %v2168, %v2182
        %v2186 = vlaneseq
        %v2187 = vshrl.u32 %v2186, 7
        %v2188 = vsub.s32 0, %v2187
        %v2189 = vrot.slane %v2157, %v2188
        %v2191 = vmul.f32 %v2183, %v2189
        %v2192 = vmul.f32 %v2184, %v2189
        %v2194 = vlaneseq
        %v2195 = vshrl.u32 %v2194, 7
        %v2196 = vsub.s32 0, %v2195
        %v2197 = vrot.slane %v2158, %v2196
        %v2199 = vadd.f32 %v2191, %v2197
        %v2200 = vadd.f32 %v2192, %v2197
        %2201 = vst.msk [vmem:[#allocation2] sm:$0xff] %vm963, %v2199
        %2202 = vst.msk [vmem:[#allocation2 + $0x8] sm:$0xff] %vm963, %v2200
        %2203 = vst.msk [vmem:[%s835] sm:$0xff] %vm963, %v2199
        %2204 = vst.msk [vmem:[%s835 + $0x8] sm:$0xff] %vm963, %v2200
        %s2205 = sand.u32 %s549, 1
        %s2206 = scalar_lea.sflag [#allocation4], %s2205
        %s2207 = sand.u32 %s549, 1
        %s2208 = smul.addr %s2207, 16
        %s2209 = scalar_lea.vmem [#allocation3], %s2208
        // Predicated region
        $region101: #{roberta_cross_encoder.1} parent=95 // pred_check
          %p2210 = pneg %p559
        $region102: #{roberta_cross_encoder.1} parent=95 // pred_check_branch
          %2212 = sbr.rel (%p2210) target = $region104
        $region103: #{roberta_cross_encoder.1} parent=95 // pred_region
          %s2214 = ssub.s32 256, 256
          %2215 = vsyncadd %s2206, %s2214
          %s2216 = smul.addr %s37, 2
          %s2217 = smul.addr %s38, 4
          %s2218 = sadd.s32 %s2216, %s2217
          %s2219 = smul.addr %s2218, 128
          %s2220 = scalar_lea.hbm %s19, %s2219
          %s2221 = sshll.u32 %s2209, 4
          %s2222 = int_to_ptr.vmem [resolvable:$true] %s2221
          %2227 = dma.vmem_to_hbm [thread:$0]  %s2222, 256, %s2220, %s2206, 128, 128, 8
        $region104: #{roberta_cross_encoder.1} parent=95 // pred_fallthru
          _
      $region96: #{roberta_cross_encoder.1} parent=5 // pred_fallthru
        _
      %p2228 = scmp.le.s32.totalorder 2, %s28
      // Predicated region
      $region105: #{roberta_cross_encoder.1} parent=5 // pred_check
        %p2229 = pneg %p2228
      $region106: #{roberta_cross_encoder.1} parent=5 // pred_check_branch
        %2231 = sbr.rel (%p2229) target = $region108
      $region107: #{roberta_cross_encoder.1} parent=5 // pred_region
        %s2232 = ssub.s32 %s28, 2
        // Predicated region
        $region109: #{roberta_cross_encoder.1} parent=107 // pred_check
          %p2233 = pneg %p565
        $region110: #{roberta_cross_encoder.1} parent=107 // pred_check_branch
          %2235 = sbr.rel (%p2233) target = $region112
        $region111: #{roberta_cross_encoder.1} parent=107 // pred_region
          %s2236 = sand.u32 %s550, 1
          %s2237 = scalar_lea.sflag [#allocation4], %s2236
          %s2238 = sand.u32 %s550, 1
          %s2239 = smul.addr %s2238, 16
          %s2240 = scalar_lea.vmem [#allocation3], %s2239
          %2241 = dma.done %s2237, 256
        $region112: #{roberta_cross_encoder.1} parent=107 // pred_fallthru
          _
      $region108: #{roberta_cross_encoder.1} parent=5 // pred_fallthru
        _
    $region6: #{roberta_cross_encoder.1} parent=1 // loop_footer
      %s32 = sadd.s32 1, %s28
    $region7: #{roberta_cross_encoder.1} parent=1 // loop_footer_branch
      %27 = sbr.rel target = $region3
    $region8: #{roberta_cross_encoder.1} parent=1 // loop_exit
      _
    %2242 = vsyncpa [#allocation4], 1
    %s2243 = scalar_lea.sflag [#allocation4], 1
    %2244 = vsyncpa %s2243, 1

</llo_original>
